<compile_context>
chip_gen: v7x
topology: tpu7x:2x2x1
jax: 0.10.0
libtpu: 0.0.40
codegen_flags: <defaults>
</compile_context>

<pallas_src>
import functools

import jax
import jax.numpy as jnp
from jax import lax
from jax.experimental import pallas as pl

INPUT_SIZE = 3      # 1 + prod(latent_dims=[2])
HIDDEN_SIZE = 32
OUTPUT_SIZE = 1
SEQ_LEN = 10
SUBLANE = 8
LANE = 128
DIN_PAD = 128       # lane-dense K for the input matmul (zero-padded from 3)


def rnn_latent_kernel(x_ref, w_rec_ref, w_out_ref, y_ref, hc_ref):
    """Whole forward in one invocation.

    x_ref     : (T*Bp, DIN_PAD) time-major, batch padded to Bp, flattened;
                column `Din` is a constant 1.0 (bias fold), columns > Din are 0.
    w_rec_ref : (DIN_PAD + H, 4H) = [w_x_aug ; w_hh.T]; gate columns in
                (i, f, o, g) order; row `Din` of w_x_aug carries b_ih+b_hh+W_ih@b_in.
    w_out_ref : (8k, LANE) rows 0..H-1 = w_out.T zero-padded to LANE lanes,
                row H = b_out zero-padded, rest zero.
    y_ref     : (T*Bp, LANE) lane-dense output (only column 0..O-1 meaningful).
    hc_ref    : (2*Bp, H) -> rows [0:Bp] = final h, rows [Bp:2Bp] = final c.
    """
    Bp2, H = hc_ref.shape
    Bp = Bp2 // 2
    T = x_ref.shape[0] // Bp
    din_pad = w_rec_ref.shape[0] - H

    # Time-independent input contribution for ALL steps: one lane-dense MXU
    # matmul; the combined bias arrives via x's ones column.
    xz = jnp.dot(x_ref[...], w_rec_ref[0:din_pad, :],
                 preferred_element_type=jnp.float32)            # (T*Bp, 4H)
    w_hh = w_rec_ref[din_pad:din_pad + H, :]                    # (H, 4H)

    h = jnp.zeros((Bp, H), jnp.float32)
    c = jnp.zeros((Bp, H), jnp.float32)
    hs = []

    # T is a trace-time constant; this Python loop fully unrolls, keeping h/c
    # (and each step's h) in vregs across steps.
    for t in range(T):
        gates = xz[t * Bp:(t + 1) * Bp, :] + jnp.dot(
            h, w_hh, preferred_element_type=jnp.float32)        # (Bp, 4H)
        # Gate columns were host-permuted to (i, f, o, g): one contiguous
        # sigmoid over 3H lanes + one tanh over H lanes per step.
        sig = jax.nn.sigmoid(gates[:, 0:3 * H])
        g_g = jnp.tanh(gates[:, 3 * H:4 * H])
        i_g = sig[:, 0:H]
        f_g = sig[:, H:2 * H]
        o_g = sig[:, 2 * H:3 * H]
        c = f_g * c + i_g * g_g
        h = o_g * jnp.tanh(c)
        hs.append(h)

    # Single batched output projection over all per-step hidden states
    # (kept in vregs, no VMEM staging) and one full-lane store.
    h_all = jnp.concatenate(hs, axis=0)                         # (T*Bp, H)
    w_out = w_out_ref[0:H, :]                                   # (H, LANE)
    b_out = w_out_ref[H:H + 1, :]                               # (1, LANE)
    y_ref[...] = jnp.dot(h_all, w_out,
                         preferred_element_type=jnp.float32) + b_out
    hc_ref[0:Bp, :] = h
    hc_ref[Bp:2 * Bp, :] = c


def pack_params(params, din_pad=DIN_PAD, lane=LANE):
    """One-time host-side weight folding + packing (hoisted out of the forward).

    Returns:
      w_rec      : (din_pad + H, 4H)  [folded input weights (+bias row) ; W_hh.T],
                   gate columns permuted torch (i,f,g,o) -> (i,f,o,g).
      w_out_pack : (round_up(H+1, 8), lane) output weights + bias row, lane-padded.
    """
    h = params["w_in"].shape[0]
    din = params["w_in"].shape[1]
    o = params["w_out"].shape[0]
    assert din + 1 <= din_pad and 4 * h <= lane

    # Exact affine composition of input_layer into the LSTM input path:
    #   W_ih @ (W_in x + b_in) + b_ih + b_hh = (W_ih W_in) x + (b_ih + b_hh + W_ih b_in)
    w_x = (params["w_ih"] @ params["w_in"]).T                   # (din, 4H)
    b_comb = params["b_ih"] + params["b_hh"] + params["w_ih"] @ params["b_in"]  # (4H,)
    w_hh_t = params["w_hh"].T                                   # (H, 4H)

    # Permute gate columns: torch order (i, f, g, o) -> kernel order (i, f, o, g).
    perm = jnp.concatenate([jnp.arange(0, h), jnp.arange(h, 2 * h),
                            jnp.arange(3 * h, 4 * h), jnp.arange(2 * h, 3 * h)])
    w_x = w_x[:, perm]
    b_comb = b_comb[perm]
    w_hh_t = w_hh_t[:, perm]

    # Lane/sublane-dense recurrence weight pack; bias folded into row `din`
    # (the wrapper puts a constant 1.0 in x's column `din`).
    w_x_aug = jnp.zeros((din_pad, 4 * h), jnp.float32)
    w_x_aug = w_x_aug.at[:din, :].set(w_x).at[din, :].set(b_comb)
    w_rec = jnp.concatenate([w_x_aug, w_hh_t], axis=0)          # (din_pad + H, 4H)

    # Output projection padded to full lanes so the final store is unmasked.
    rows = ((h + 1 + SUBLANE - 1) // SUBLANE) * SUBLANE
    w_out_pack = jnp.zeros((rows, lane), jnp.float32)
    w_out_pack = w_out_pack.at[:h, :o].set(params["w_out"].T)
    w_out_pack = w_out_pack.at[h, :o].set(params["b_out"])
    return w_rec, w_out_pack


@functools.partial(jax.jit, static_argnames=("out_size",))
def rnn_with_latent_forward(x, w_rec, w_out_pack, out_size=OUTPUT_SIZE):
    """x: (B, T, Din) float32 (PyTorch batch-major layout).
    Returns (outputs stacked along dim 1 -> (B, T, O), (h, c)).
    Jitted so all pre/post layout plumbing fuses around the single pallas_call."""
    B, T, Din = x.shape
    lane = w_out_pack.shape[1]
    H = w_rec.shape[1] // 4
    din_pad = w_rec.shape[0] - H
    Bp = ((B + SUBLANE - 1) // SUBLANE) * SUBLANE   # pad batch to sublane multiple

    # Time-major, batch- and lane-padded input with a constant ones column at
    # index Din (carries the folded biases through the matmul).
    x_tm = jnp.transpose(x, (1, 0, 2))                              # (T, B, Din)
    x_pad = jnp.pad(x_tm, ((0, 0), (0, Bp - B), (0, din_pad - Din)))
    x_pad = x_pad.at[:, :, Din].set(1.0)                            # bias fold
    x_flat = x_pad.reshape(T * Bp, din_pad)                         # (T*Bp, din_pad)

    y_flat, hc = pl.pallas_call(
        rnn_latent_kernel,
        out_shape=(jax.ShapeDtypeStruct((T * Bp, lane), jnp.float32),
                   jax.ShapeDtypeStruct((2 * Bp, H), jnp.float32)),
    )(x_flat, w_rec, w_out_pack)

    outputs = jnp.transpose(
        y_flat[:, :out_size].reshape(T, Bp, out_size)[:, :B, :], (1, 0, 2))
    h = hc[0:B]
    c = hc[Bp:Bp + B]
    return outputs, (h, c)


def rnn_with_latent_reference(x, params):
    """Pure-JAX reference of the PyTorch forward (torch gate order i,f,g,o)."""
    B, T, Din = x.shape
    H = params["w_in"].shape[0]
    z = jnp.einsum("btd,hd->bth", x, params["w_in"]) + params["b_in"]

    def step(carry, z_t):
        h, c = carry
        gates = (z_t @ params["w_ih"].T + params["b_ih"]
                 + h @ params["w_hh"].T + params["b_hh"])
        i_g = jax.nn.sigmoid(gates[:, 0:H])
        f_g = jax.nn.sigmoid(gates[:, H:2 * H])
        g_g = jnp.tanh(gates[:, 2 * H:3 * H])
        o_g = jax.nn.sigmoid(gates[:, 3 * H:4 * H])
        c_new = f_g * c + i_g * g_g
        h_new = o_g * jnp.tanh(c_new)
        y = h_new @ params["w_out"].T + params["b_out"]
        return (h_new, c_new), y

    (h, c), ys = lax.scan(step, (jnp.zeros((B, H)), jnp.zeros((B, H))),
                          jnp.transpose(z, (1, 0, 2)))
    return jnp.transpose(ys, (1, 0, 2)), (h, c)


def init_params(key, din=INPUT_SIZE, h=HIDDEN_SIZE, o=OUTPUT_SIZE):
    """Deterministic init matching the PyTorch parameter shapes
    (uniform(-1/sqrt(fan_in), 1/sqrt(fan_in)) like nn.Linear / nn.LSTMCell defaults)."""
    ks = jax.random.split(key, 8)
    u = lambda k, shape, fan: jax.random.uniform(
        k, shape, jnp.float32, -1.0 / jnp.sqrt(fan), 1.0 / jnp.sqrt(fan))
    return {
        "w_in": u(ks[0], (h, din), din),      # input_layer.weight
        "b_in": u(ks[1], (h,), din),          # input_layer.bias
        "w_ih": u(ks[2], (4 * h, h), h),      # lstm_cell.weight_ih
        "b_ih": u(ks[3], (4 * h,), h),        # lstm_cell.bias_ih
        "w_hh": u(ks[4], (4 * h, h), h),      # lstm_cell.weight_hh
        "b_hh": u(ks[5], (4 * h,), h),        # lstm_cell.bias_hh
        "w_out": u(ks[6], (o, h), h),         # output_layer.weight
        "b_out": u(ks[7], (o,), h),           # output_layer.bias
    }


if __name__ == "__main__":
    key = jax.random.PRNGKey(0)
    k_param, k_x = jax.random.split(key)
    params = init_params(k_param)

    # One-time weight folding/packing (hoisted out of the per-call path).
    w_rec, w_out_pack = pack_params(params)
    jax.block_until_ready((w_rec, w_out_pack))

    B = 2
    # Forward input already contains the concatenated latent (input_size = 3).
    x = jax.random.normal(k_x, (B, SEQ_LEN, INPUT_SIZE), jnp.float32)

    outputs, (h, c) = rnn_with_latent_forward(x, w_rec, w_out_pack,
                                              out_size=OUTPUT_SIZE)
    jax.block_until_ready((outputs, h, c))

    ref_out, (ref_h, ref_c) = rnn_with_latent_reference(x, params)
    assert outputs.shape == (B, SEQ_LEN, OUTPUT_SIZE)
    assert h.shape == (B, HIDDEN_SIZE) and c.shape == (B, HIDDEN_SIZE)
    # Slightly relaxed tolerance: input-layer folding reorders the f32 matmuls.
    assert jnp.allclose(outputs, ref_out, atol=1e-4, rtol=1e-4)
    assert jnp.allclose(h, ref_h, atol=1e-4, rtol=1e-4)
    assert jnp.allclose(c, ref_c, atol=1e-4, rtol=1e-4)

    # TODO(synk): training-side machinery (WU/LU optimizers, update_latent,
    # combine_input_with_latent, forward_generate) is host-side PyTorch logic,
    # not part of the forward pass, and is not translated to Pallas.
    print("KERNEL_OK")
</pallas_src>

<mosaic_0001>
module attributes {stable_mosaic.version = 11 : i64} {
  func.func @rnn_latent_kernel(%arg0: memref<80x128xf32, #tpu.memory_space<vmem>>, %arg1: memref<160x128xf32, #tpu.memory_space<vmem>>, %arg2: memref<40x128xf32, #tpu.memory_space<vmem>>, %arg3: memref<80x128xf32, #tpu.memory_space<vmem>>, %arg4: memref<16x32xf32, #tpu.memory_space<vmem>>) attributes {dimension_semantics = [], scalar_prefetch = 0 : i64, scratch_operands = 0 : i64, tpu.core_type = #tpu.core_type<tc>} {
    %c0 = arith.constant 0 : index
    %c0_0 = arith.constant 0 : index
    %0 = vector.load %arg0[%c0, %c0_0] : memref<80x128xf32, #tpu.memory_space<vmem>>, vector<80x128xf32>
    %c0_1 = arith.constant 0 : index
    %c0_2 = arith.constant 0 : index
    %1 = vector.load %arg1[%c0_1, %c0_2] : memref<160x128xf32, #tpu.memory_space<vmem>>, vector<128x128xf32>
    %cst = arith.constant dense<0.000000e+00> : vector<80x128xf32>
    %2 = tpu.matmul %0, %1, %cst {dimension_numbers = #tpu.dot_dimension_numbers<[1], [0], [0], [1], [0, 0, 1, 1], [], []>} : vector<80x128xf32>, vector<128x128xf32>, vector<80x128xf32> -> vector<80x128xf32>
    %c128 = arith.constant 128 : index
    %c0_3 = arith.constant 0 : index
    %3 = vector.load %arg1[%c128, %c0_3] : memref<160x128xf32, #tpu.memory_space<vmem>>, vector<32x128xf32>
    %cst_4 = arith.constant 0.000000e+00 : f32
    %4 = vector.broadcast %cst_4 : f32 to vector<8x32xf32>
    %cst_5 = arith.constant 0.000000e+00 : f32
    %5 = vector.broadcast %cst_5 : f32 to vector<8x32xf32>
    %6 = vector.extract_strided_slice %2 {offsets = [0, 0], sizes = [8, 128], strides = [1, 1]} : vector<80x128xf32> to vector<8x128xf32>
    %cst_6 = arith.constant dense<0.000000e+00> : vector<8x128xf32>
    %7 = tpu.matmul %4, %3, %cst_6 {dimension_numbers = #tpu.dot_dimension_numbers<[1], [0], [0], [1], [0, 0, 1, 1], [], []>} : vector<8x32xf32>, vector<32x128xf32>, vector<8x128xf32> -> vector<8x128xf32>
    %8 = arith.addf %6, %7 : vector<8x128xf32>
    %9 = vector.extract_strided_slice %8 {offsets = [0, 0], sizes = [8, 96], strides = [1, 1]} : vector<8x128xf32> to vector<8x96xf32>
    %10 = arith.negf %9 : vector<8x96xf32>
    %11 = math.exp %10 : vector<8x96xf32>
    %cst_7 = arith.constant 1.000000e+00 : f32
    %12 = vector.broadcast %cst_7 : f32 to vector<8x96xf32>
    %13 = arith.addf %12, %11 : vector<8x96xf32>
    %14 = arith.divf %12, %13 : vector<8x96xf32>
    %15 = vector.extract_strided_slice %8 {offsets = [0, 96], sizes = [8, 32], strides = [1, 1]} : vector<8x128xf32> to vector<8x32xf32>
    %16 = math.tanh %15 : vector<8x32xf32>
    %17 = vector.extract_strided_slice %14 {offsets = [0, 0], sizes = [8, 32], strides = [1, 1]} : vector<8x96xf32> to vector<8x32xf32>
    %18 = vector.extract_strided_slice %14 {offsets = [0, 32], sizes = [8, 32], strides = [1, 1]} : vector<8x96xf32> to vector<8x32xf32>
    %19 = vector.extract_strided_slice %14 {offsets = [0, 64], sizes = [8, 32], strides = [1, 1]} : vector<8x96xf32> to vector<8x32xf32>
    %20 = arith.mulf %18, %5 : vector<8x32xf32>
    %21 = arith.mulf %17, %16 : vector<8x32xf32>
    %22 = arith.addf %20, %21 : vector<8x32xf32>
    %23 = math.tanh %22 : vector<8x32xf32>
    %24 = arith.mulf %19, %23 : vector<8x32xf32>
    %25 = vector.extract_strided_slice %2 {offsets = [8, 0], sizes = [8, 128], strides = [1, 1]} : vector<80x128xf32> to vector<8x128xf32>
    %cst_8 = arith.constant dense<0.000000e+00> : vector<8x128xf32>
    %26 = tpu.matmul %24, %3, %cst_8 {dimension_numbers = #tpu.dot_dimension_numbers<[1], [0], [0], [1], [0, 0, 1, 1], [], []>} : vector<8x32xf32>, vector<32x128xf32>, vector<8x128xf32> -> vector<8x128xf32>
    %27 = arith.addf %25, %26 : vector<8x128xf32>
    %28 = vector.extract_strided_slice %27 {offsets = [0, 0], sizes = [8, 96], strides = [1, 1]} : vector<8x128xf32> to vector<8x96xf32>
    %29 = arith.negf %28 : vector<8x96xf32>
    %30 = math.exp %29 : vector<8x96xf32>
    %cst_9 = arith.constant 1.000000e+00 : f32
    %31 = vector.broadcast %cst_9 : f32 to vector<8x96xf32>
    %32 = arith.addf %31, %30 : vector<8x96xf32>
    %33 = arith.divf %31, %32 : vector<8x96xf32>
    %34 = vector.extract_strided_slice %27 {offsets = [0, 96], sizes = [8, 32], strides = [1, 1]} : vector<8x128xf32> to vector<8x32xf32>
    %35 = math.tanh %34 : vector<8x32xf32>
    %36 = vector.extract_strided_slice %33 {offsets = [0, 0], sizes = [8, 32], strides = [1, 1]} : vector<8x96xf32> to vector<8x32xf32>
    %37 = vector.extract_strided_slice %33 {offsets = [0, 32], sizes = [8, 32], strides = [1, 1]} : vector<8x96xf32> to vector<8x32xf32>
    %38 = vector.extract_strided_slice %33 {offsets = [0, 64], sizes = [8, 32], strides = [1, 1]} : vector<8x96xf32> to vector<8x32xf32>
    %39 = arith.mulf %37, %22 : vector<8x32xf32>
    %40 = arith.mulf %36, %35 : vector<8x32xf32>
    %41 = arith.addf %39, %40 : vector<8x32xf32>
    %42 = math.tanh %41 : vector<8x32xf32>
    %43 = arith.mulf %38, %42 : vector<8x32xf32>
    %44 = vector.extract_strided_slice %2 {offsets = [16, 0], sizes = [8, 128], strides = [1, 1]} : vector<80x128xf32> to vector<8x128xf32>
    %cst_10 = arith.constant dense<0.000000e+00> : vector<8x128xf32>
    %45 = tpu.matmul %43, %3, %cst_10 {dimension_numbers = #tpu.dot_dimension_numbers<[1], [0], [0], [1], [0, 0, 1, 1], [], []>} : vector<8x32xf32>, vector<32x128xf32>, vector<8x128xf32> -> vector<8x128xf32>
    %46 = arith.addf %44, %45 : vector<8x128xf32>
    %47 = vector.extract_strided_slice %46 {offsets = [0, 0], sizes = [8, 96], strides = [1, 1]} : vector<8x128xf32> to vector<8x96xf32>
    %48 = arith.negf %47 : vector<8x96xf32>
    %49 = math.exp %48 : vector<8x96xf32>
    %cst_11 = arith.constant 1.000000e+00 : f32
    %50 = vector.broadcast %cst_11 : f32 to vector<8x96xf32>
    %51 = arith.addf %50, %49 : vector<8x96xf32>
    %52 = arith.divf %50, %51 : vector<8x96xf32>
    %53 = vector.extract_strided_slice %46 {offsets = [0, 96], sizes = [8, 32], strides = [1, 1]} : vector<8x128xf32> to vector<8x32xf32>
    %54 = math.tanh %53 : vector<8x32xf32>
    %55 = vector.extract_strided_slice %52 {offsets = [0, 0], sizes = [8, 32], strides = [1, 1]} : vector<8x96xf32> to vector<8x32xf32>
    %56 = vector.extract_strided_slice %52 {offsets = [0, 32], sizes = [8, 32], strides = [1, 1]} : vector<8x96xf32> to vector<8x32xf32>
    %57 = vector.extract_strided_slice %52 {offsets = [0, 64], sizes = [8, 32], strides = [1, 1]} : vector<8x96xf32> to vector<8x32xf32>
    %58 = arith.mulf %56, %41 : vector<8x32xf32>
    %59 = arith.mulf %55, %54 : vector<8x32xf32>
    %60 = arith.addf %58, %59 : vector<8x32xf32>
    %61 = math.tanh %60 : vector<8x32xf32>
    %62 = arith.mulf %57, %61 : vector<8x32xf32>
    %63 = vector.extract_strided_slice %2 {offsets = [24, 0], sizes = [8, 128], strides = [1, 1]} : vector<80x128xf32> to vector<8x128xf32>
    %cst_12 = arith.constant dense<0.000000e+00> : vector<8x128xf32>
    %64 = tpu.matmul %62, %3, %cst_12 {dimension_numbers = #tpu.dot_dimension_numbers<[1], [0], [0], [1], [0, 0, 1, 1], [], []>} : vector<8x32xf32>, vector<32x128xf32>, vector<8x128xf32> -> vector<8x128xf32>
    %65 = arith.addf %63, %64 : vector<8x128xf32>
    %66 = vector.extract_strided_slice %65 {offsets = [0, 0], sizes = [8, 96], strides = [1, 1]} : vector<8x128xf32> to vector<8x96xf32>
    %67 = arith.negf %66 : vector<8x96xf32>
    %68 = math.exp %67 : vector<8x96xf32>
    %cst_13 = arith.constant 1.000000e+00 : f32
    %69 = vector.broadcast %cst_13 : f32 to vector<8x96xf32>
    %70 = arith.addf %69, %68 : vector<8x96xf32>
    %71 = arith.divf %69, %70 : vector<8x96xf32>
    %72 = vector.extract_strided_slice %65 {offsets = [0, 96], sizes = [8, 32], strides = [1, 1]} : vector<8x128xf32> to vector<8x32xf32>
    %73 = math.tanh %72 : vector<8x32xf32>
    %74 = vector.extract_strided_slice %71 {offsets = [0, 0], sizes = [8, 32], strides = [1, 1]} : vector<8x96xf32> to vector<8x32xf32>
    %75 = vector.extract_strided_slice %71 {offsets = [0, 32], sizes = [8, 32], strides = [1, 1]} : vector<8x96xf32> to vector<8x32xf32>
    %76 = vector.extract_strided_slice %71 {offsets = [0, 64], sizes = [8, 32], strides = [1, 1]} : vector<8x96xf32> to vector<8x32xf32>
    %77 = arith.mulf %75, %60 : vector<8x32xf32>
    %78 = arith.mulf %74, %73 : vector<8x32xf32>
    %79 = arith.addf %77, %78 : vector<8x32xf32>
    %80 = math.tanh %79 : vector<8x32xf32>
    %81 = arith.mulf %76, %80 : vector<8x32xf32>
    %82 = vector.extract_strided_slice %2 {offsets = [32, 0], sizes = [8, 128], strides = [1, 1]} : vector<80x128xf32> to vector<8x128xf32>
    %cst_14 = arith.constant dense<0.000000e+00> : vector<8x128xf32>
    %83 = tpu.matmul %81, %3, %cst_14 {dimension_numbers = #tpu.dot_dimension_numbers<[1], [0], [0], [1], [0, 0, 1, 1], [], []>} : vector<8x32xf32>, vector<32x128xf32>, vector<8x128xf32> -> vector<8x128xf32>
    %84 = arith.addf %82, %83 : vector<8x128xf32>
    %85 = vector.extract_strided_slice %84 {offsets = [0, 0], sizes = [8, 96], strides = [1, 1]} : vector<8x128xf32> to vector<8x96xf32>
    %86 = arith.negf %85 : vector<8x96xf32>
    %87 = math.exp %86 : vector<8x96xf32>
    %cst_15 = arith.constant 1.000000e+00 : f32
    %88 = vector.broadcast %cst_15 : f32 to vector<8x96xf32>
    %89 = arith.addf %88, %87 : vector<8x96xf32>
    %90 = arith.divf %88, %89 : vector<8x96xf32>
    %91 = vector.extract_strided_slice %84 {offsets = [0, 96], sizes = [8, 32], strides = [1, 1]} : vector<8x128xf32> to vector<8x32xf32>
    %92 = math.tanh %91 : vector<8x32xf32>
    %93 = vector.extract_strided_slice %90 {offsets = [0, 0], sizes = [8, 32], strides = [1, 1]} : vector<8x96xf32> to vector<8x32xf32>
    %94 = vector.extract_strided_slice %90 {offsets = [0, 32], sizes = [8, 32], strides = [1, 1]} : vector<8x96xf32> to vector<8x32xf32>
    %95 = vector.extract_strided_slice %90 {offsets = [0, 64], sizes = [8, 32], strides = [1, 1]} : vector<8x96xf32> to vector<8x32xf32>
    %96 = arith.mulf %94, %79 : vector<8x32xf32>
    %97 = arith.mulf %93, %92 : vector<8x32xf32>
    %98 = arith.addf %96, %97 : vector<8x32xf32>
    %99 = math.tanh %98 : vector<8x32xf32>
    %100 = arith.mulf %95, %99 : vector<8x32xf32>
    %101 = vector.extract_strided_slice %2 {offsets = [40, 0], sizes = [8, 128], strides = [1, 1]} : vector<80x128xf32> to vector<8x128xf32>
    %cst_16 = arith.constant dense<0.000000e+00> : vector<8x128xf32>
    %102 = tpu.matmul %100, %3, %cst_16 {dimension_numbers = #tpu.dot_dimension_numbers<[1], [0], [0], [1], [0, 0, 1, 1], [], []>} : vector<8x32xf32>, vector<32x128xf32>, vector<8x128xf32> -> vector<8x128xf32>
    %103 = arith.addf %101, %102 : vector<8x128xf32>
    %104 = vector.extract_strided_slice %103 {offsets = [0, 0], sizes = [8, 96], strides = [1, 1]} : vector<8x128xf32> to vector<8x96xf32>
    %105 = arith.negf %104 : vector<8x96xf32>
    %106 = math.exp %105 : vector<8x96xf32>
    %cst_17 = arith.constant 1.000000e+00 : f32
    %107 = vector.broadcast %cst_17 : f32 to vector<8x96xf32>
    %108 = arith.addf %107, %106 : vector<8x96xf32>
    %109 = arith.divf %107, %108 : vector<8x96xf32>
    %110 = vector.extract_strided_slice %103 {offsets = [0, 96], sizes = [8, 32], strides = [1, 1]} : vector<8x128xf32> to vector<8x32xf32>
    %111 = math.tanh %110 : vector<8x32xf32>
    %112 = vector.extract_strided_slice %109 {offsets = [0, 0], sizes = [8, 32], strides = [1, 1]} : vector<8x96xf32> to vector<8x32xf32>
    %113 = vector.extract_strided_slice %109 {offsets = [0, 32], sizes = [8, 32], strides = [1, 1]} : vector<8x96xf32> to vector<8x32xf32>
    %114 = vector.extract_strided_slice %109 {offsets = [0, 64], sizes = [8, 32], strides = [1, 1]} : vector<8x96xf32> to vector<8x32xf32>
    %115 = arith.mulf %113, %98 : vector<8x32xf32>
    %116 = arith.mulf %112, %111 : vector<8x32xf32>
    %117 = arith.addf %115, %116 : vector<8x32xf32>
    %118 = math.tanh %117 : vector<8x32xf32>
    %119 = arith.mulf %114, %118 : vector<8x32xf32>
    %120 = vector.extract_strided_slice %2 {offsets = [48, 0], sizes = [8, 128], strides = [1, 1]} : vector<80x128xf32> to vector<8x128xf32>
    %cst_18 = arith.constant dense<0.000000e+00> : vector<8x128xf32>
    %121 = tpu.matmul %119, %3, %cst_18 {dimension_numbers = #tpu.dot_dimension_numbers<[1], [0], [0], [1], [0, 0, 1, 1], [], []>} : vector<8x32xf32>, vector<32x128xf32>, vector<8x128xf32> -> vector<8x128xf32>
    %122 = arith.addf %120, %121 : vector<8x128xf32>
    %123 = vector.extract_strided_slice %122 {offsets = [0, 0], sizes = [8, 96], strides = [1, 1]} : vector<8x128xf32> to vector<8x96xf32>
    %124 = arith.negf %123 : vector<8x96xf32>
    %125 = math.exp %124 : vector<8x96xf32>
    %cst_19 = arith.constant 1.000000e+00 : f32
    %126 = vector.broadcast %cst_19 : f32 to vector<8x96xf32>
    %127 = arith.addf %126, %125 : vector<8x96xf32>
    %128 = arith.divf %126, %127 : vector<8x96xf32>
    %129 = vector.extract_strided_slice %122 {offsets = [0, 96], sizes = [8, 32], strides = [1, 1]} : vector<8x128xf32> to vector<8x32xf32>
    %130 = math.tanh %129 : vector<8x32xf32>
    %131 = vector.extract_strided_slice %128 {offsets = [0, 0], sizes = [8, 32], strides = [1, 1]} : vector<8x96xf32> to vector<8x32xf32>
    %132 = vector.extract_strided_slice %128 {offsets = [0, 32], sizes = [8, 32], strides = [1, 1]} : vector<8x96xf32> to vector<8x32xf32>
    %133 = vector.extract_strided_slice %128 {offsets = [0, 64], sizes = [8, 32], strides = [1, 1]} : vector<8x96xf32> to vector<8x32xf32>
    %134 = arith.mulf %132, %117 : vector<8x32xf32>
    %135 = arith.mulf %131, %130 : vector<8x32xf32>
    %136 = arith.addf %134, %135 : vector<8x32xf32>
    %137 = math.tanh %136 : vector<8x32xf32>
    %138 = arith.mulf %133, %137 : vector<8x32xf32>
    %139 = vector.extract_strided_slice %2 {offsets = [56, 0], sizes = [8, 128], strides = [1, 1]} : vector<80x128xf32> to vector<8x128xf32>
    %cst_20 = arith.constant dense<0.000000e+00> : vector<8x128xf32>
    %140 = tpu.matmul %138, %3, %cst_20 {dimension_numbers = #tpu.dot_dimension_numbers<[1], [0], [0], [1], [0, 0, 1, 1], [], []>} : vector<8x32xf32>, vector<32x128xf32>, vector<8x128xf32> -> vector<8x128xf32>
    %141 = arith.addf %139, %140 : vector<8x128xf32>
    %142 = vector.extract_strided_slice %141 {offsets = [0, 0], sizes = [8, 96], strides = [1, 1]} : vector<8x128xf32> to vector<8x96xf32>
    %143 = arith.negf %142 : vector<8x96xf32>
    %144 = math.exp %143 : vector<8x96xf32>
    %cst_21 = arith.constant 1.000000e+00 : f32
    %145 = vector.broadcast %cst_21 : f32 to vector<8x96xf32>
    %146 = arith.addf %145, %144 : vector<8x96xf32>
    %147 = arith.divf %145, %146 : vector<8x96xf32>
    %148 = vector.extract_strided_slice %141 {offsets = [0, 96], sizes = [8, 32], strides = [1, 1]} : vector<8x128xf32> to vector<8x32xf32>
    %149 = math.tanh %148 : vector<8x32xf32>
    %150 = vector.extract_strided_slice %147 {offsets = [0, 0], sizes = [8, 32], strides = [1, 1]} : vector<8x96xf32> to vector<8x32xf32>
    %151 = vector.extract_strided_slice %147 {offsets = [0, 32], sizes = [8, 32], strides = [1, 1]} : vector<8x96xf32> to vector<8x32xf32>
    %152 = vector.extract_strided_slice %147 {offsets = [0, 64], sizes = [8, 32], strides = [1, 1]} : vector<8x96xf32> to vector<8x32xf32>
    %153 = arith.mulf %151, %136 : vector<8x32xf32>
    %154 = arith.mulf %150, %149 : vector<8x32xf32>
    %155 = arith.addf %153, %154 : vector<8x32xf32>
    %156 = math.tanh %155 : vector<8x32xf32>
    %157 = arith.mulf %152, %156 : vector<8x32xf32>
    %158 = vector.extract_strided_slice %2 {offsets = [64, 0], sizes = [8, 128], strides = [1, 1]} : vector<80x128xf32> to vector<8x128xf32>
    %cst_22 = arith.constant dense<0.000000e+00> : vector<8x128xf32>
    %159 = tpu.matmul %157, %3, %cst_22 {dimension_numbers = #tpu.dot_dimension_numbers<[1], [0], [0], [1], [0, 0, 1, 1], [], []>} : vector<8x32xf32>, vector<32x128xf32>, vector<8x128xf32> -> vector<8x128xf32>
    %160 = arith.addf %158, %159 : vector<8x128xf32>
    %161 = vector.extract_strided_slice %160 {offsets = [0, 0], sizes = [8, 96], strides = [1, 1]} : vector<8x128xf32> to vector<8x96xf32>
    %162 = arith.negf %161 : vector<8x96xf32>
    %163 = math.exp %162 : vector<8x96xf32>
    %cst_23 = arith.constant 1.000000e+00 : f32
    %164 = vector.broadcast %cst_23 : f32 to vector<8x96xf32>
    %165 = arith.addf %164, %163 : vector<8x96xf32>
    %166 = arith.divf %164, %165 : vector<8x96xf32>
    %167 = vector.extract_strided_slice %160 {offsets = [0, 96], sizes = [8, 32], strides = [1, 1]} : vector<8x128xf32> to vector<8x32xf32>
    %168 = math.tanh %167 : vector<8x32xf32>
    %169 = vector.extract_strided_slice %166 {offsets = [0, 0], sizes = [8, 32], strides = [1, 1]} : vector<8x96xf32> to vector<8x32xf32>
    %170 = vector.extract_strided_slice %166 {offsets = [0, 32], sizes = [8, 32], strides = [1, 1]} : vector<8x96xf32> to vector<8x32xf32>
    %171 = vector.extract_strided_slice %166 {offsets = [0, 64], sizes = [8, 32], strides = [1, 1]} : vector<8x96xf32> to vector<8x32xf32>
    %172 = arith.mulf %170, %155 : vector<8x32xf32>
    %173 = arith.mulf %169, %168 : vector<8x32xf32>
    %174 = arith.addf %172, %173 : vector<8x32xf32>
    %175 = math.tanh %174 : vector<8x32xf32>
    %176 = arith.mulf %171, %175 : vector<8x32xf32>
    %177 = vector.extract_strided_slice %2 {offsets = [72, 0], sizes = [8, 128], strides = [1, 1]} : vector<80x128xf32> to vector<8x128xf32>
    %cst_24 = arith.constant dense<0.000000e+00> : vector<8x128xf32>
    %178 = tpu.matmul %176, %3, %cst_24 {dimension_numbers = #tpu.dot_dimension_numbers<[1], [0], [0], [1], [0, 0, 1, 1], [], []>} : vector<8x32xf32>, vector<32x128xf32>, vector<8x128xf32> -> vector<8x128xf32>
    %179 = arith.addf %177, %178 : vector<8x128xf32>
    %180 = vector.extract_strided_slice %179 {offsets = [0, 0], sizes = [8, 96], strides = [1, 1]} : vector<8x128xf32> to vector<8x96xf32>
    %181 = arith.negf %180 : vector<8x96xf32>
    %182 = math.exp %181 : vector<8x96xf32>
    %cst_25 = arith.constant 1.000000e+00 : f32
    %183 = vector.broadcast %cst_25 : f32 to vector<8x96xf32>
    %184 = arith.addf %183, %182 : vector<8x96xf32>
    %185 = arith.divf %183, %184 : vector<8x96xf32>
    %186 = vector.extract_strided_slice %179 {offsets = [0, 96], sizes = [8, 32], strides = [1, 1]} : vector<8x128xf32> to vector<8x32xf32>
    %187 = math.tanh %186 : vector<8x32xf32>
    %188 = vector.extract_strided_slice %185 {offsets = [0, 0], sizes = [8, 32], strides = [1, 1]} : vector<8x96xf32> to vector<8x32xf32>
    %189 = vector.extract_strided_slice %185 {offsets = [0, 32], sizes = [8, 32], strides = [1, 1]} : vector<8x96xf32> to vector<8x32xf32>
    %190 = vector.extract_strided_slice %185 {offsets = [0, 64], sizes = [8, 32], strides = [1, 1]} : vector<8x96xf32> to vector<8x32xf32>
    %191 = arith.mulf %189, %174 : vector<8x32xf32>
    %192 = arith.mulf %188, %187 : vector<8x32xf32>
    %193 = arith.addf %191, %192 : vector<8x32xf32>
    %194 = math.tanh %193 : vector<8x32xf32>
    %195 = arith.mulf %190, %194 : vector<8x32xf32>
    %196 = tpu.concatenate %24, %43, %62, %81, %100, %119, %138, %157, %176, %195 in 0 : vector<8x32xf32>, vector<8x32xf32>, vector<8x32xf32>, vector<8x32xf32>, vector<8x32xf32>, vector<8x32xf32>, vector<8x32xf32>, vector<8x32xf32>, vector<8x32xf32>, vector<8x32xf32> -> vector<80x32xf32>
    %c0_26 = arith.constant 0 : index
    %c0_27 = arith.constant 0 : index
    %197 = vector.load %arg2[%c0_26, %c0_27] : memref<40x128xf32, #tpu.memory_space<vmem>>, vector<32x128xf32>
    %c32 = arith.constant 32 : index
    %c0_28 = arith.constant 0 : index
    %198 = vector.load %arg2[%c32, %c0_28] : memref<40x128xf32, #tpu.memory_space<vmem>>, vector<1x128xf32>
    %cst_29 = arith.constant dense<0.000000e+00> : vector<80x128xf32>
    %199 = tpu.matmul %196, %197, %cst_29 {dimension_numbers = #tpu.dot_dimension_numbers<[1], [0], [0], [1], [0, 0, 1, 1], [], []>} : vector<80x32xf32>, vector<32x128xf32>, vector<80x128xf32> -> vector<80x128xf32>
    %200 = vector.broadcast %198 : vector<1x128xf32> to vector<80x128xf32>
    %201 = arith.addf %199, %200 : vector<80x128xf32>
    %c0_30 = arith.constant 0 : index
    %c0_31 = arith.constant 0 : index
    %202 = vector.load %arg3[%c0_30, %c0_31] : memref<80x128xf32, #tpu.memory_space<vmem>>, vector<80x128xf32>
    tpu.vector_store %arg3[%c0_30, %c0_31], %201 {strides = array<i32>} : memref<80x128xf32, #tpu.memory_space<vmem>>, vector<80x128xf32>,
    %c0_32 = arith.constant 0 : index
    %c0_33 = arith.constant 0 : index
    %203 = vector.load %arg4[%c0_32, %c0_33] : memref<16x32xf32, #tpu.memory_space<vmem>>, vector<8x32xf32>
    tpu.vector_store %arg4[%c0_32, %c0_33], %195 {strides = array<i32>} : memref<16x32xf32, #tpu.memory_space<vmem>>, vector<8x32xf32>,
    %c8 = arith.constant 8 : index
    %c0_34 = arith.constant 0 : index
    %204 = vector.load %arg4[%c8, %c0_34] : memref<16x32xf32, #tpu.memory_space<vmem>>, vector<8x32xf32>
    tpu.vector_store %arg4[%c8, %c0_34], %193 {strides = array<i32>} : memref<16x32xf32, #tpu.memory_space<vmem>>, vector<8x32xf32>,
    return
  }
}

</mosaic_0001>

<llo_original>
// kernel: rnn_with_latent_forward.1
$region0: #{rnn_with_latent_forward.1}
  #allocation0 [shape = 'u32[]', space=smem, size = 0x4, offset = 0x4, fixed_abs, tag = 'smem constant byte address 0x4 - core index']
  #allocation1 [shape = 'u32[144,128]{1,0:T(1,128)}', space=vmem, size = 0x12000, scoped, tag = 'internal scratch']
  %s0 = inlined_call_operand.vmem [shape: f32[80,128], index: 0, kind: input, shape index: {}]
  %s1 = inlined_call_operand.vmem [shape: f32[160,128], index: 1, kind: input, shape index: {}]
  %s2 = inlined_call_operand.vmem [shape: f32[40,128], index: 2, kind: input, shape index: {}]
  %s3 = inlined_call_operand.vmem [shape: f32[80,128], index: 3, kind: output, shape index: {0}]
  %s4 = inlined_call_operand.vmem [shape: f32[16,32], index: 4, kind: output, shape index: {1}]
  %5 = xla_tuple %s3, %s4
  %s6 = sld [smem:[#allocation0]]
  $region30: #{rnn_with_latent_forward.1} parent=0
    _
  %s8 = ssub.s32 1, %s6
  %s9 = scalar_select 0, %s8, %s6
  // Predicated region
  $region2: #{rnn_with_latent_forward.1} parent=0 // pred_check
    _
  $region3: #{rnn_with_latent_forward.1} parent=0 // pred_check_branch
    %11 = sbr.rel (0) target = $region5
  $region4: #{rnn_with_latent_forward.1} parent=0 // pred_region
    _
  $region5: #{rnn_with_latent_forward.1} parent=0 // pred_fallthru
    _
  // Predicated region
  $region6: #{rnn_with_latent_forward.1} parent=0 // pred_check
    _
  $region7: #{rnn_with_latent_forward.1} parent=0 // pred_check_branch
    %13 = sbr.rel (0) target = $region9
  $region8: #{rnn_with_latent_forward.1} parent=0 // pred_region
    _
  $region9: #{rnn_with_latent_forward.1} parent=0 // pred_fallthru
    _
  // Predicated region
  $region10: #{rnn_with_latent_forward.1} parent=0 // pred_check
    _
  $region11: #{rnn_with_latent_forward.1} parent=0 // pred_check_branch
    %15 = sbr.rel (0) target = $region13
  $region12: #{rnn_with_latent_forward.1} parent=0 // pred_region
    _
  $region13: #{rnn_with_latent_forward.1} parent=0 // pred_fallthru
    _
  %v16 = vld [vmem:[%s0] sm:$0xff]
  %v17 = vld [vmem:[%s0 + $0x8] sm:$0xff]
  %v18 = vld [vmem:[%s0 + $0x10] sm:$0xff]
  %v19 = vld [vmem:[%s0 + $0x18] sm:$0xff]
  %v20 = vld [vmem:[%s0 + $0x20] sm:$0xff]
  %v21 = vld [vmem:[%s0 + $0x28] sm:$0xff]
  %v22 = vld [vmem:[%s0 + $0x30] sm:$0xff]
  %v23 = vld [vmem:[%s0 + $0x38] sm:$0xff]
  %v24 = vld [vmem:[%s0 + $0x40] sm:$0xff]
  %v25 = vld [vmem:[%s0 + $0x48] sm:$0xff]
  %v26 = vld [vmem:[%s1] sm:$0xff]
  %v27 = vld [vmem:[%s1 + $0x8] sm:$0xff]
  %v28 = vld [vmem:[%s1 + $0x10] sm:$0xff]
  %v29 = vld [vmem:[%s1 + $0x18] sm:$0xff]
  %v30 = vld [vmem:[%s1 + $0x20] sm:$0xff]
  %v31 = vld [vmem:[%s1 + $0x28] sm:$0xff]
  %v32 = vld [vmem:[%s1 + $0x30] sm:$0xff]
  %v33 = vld [vmem:[%s1 + $0x38] sm:$0xff]
  %v34 = vld [vmem:[%s1 + $0x40] sm:$0xff]
  %v35 = vld [vmem:[%s1 + $0x48] sm:$0xff]
  %v36 = vld [vmem:[%s1 + $0x50] sm:$0xff]
  %v37 = vld [vmem:[%s1 + $0x58] sm:$0xff]
  %v38 = vld [vmem:[%s1 + $0x60] sm:$0xff]
  %v39 = vld [vmem:[%s1 + $0x68] sm:$0xff]
  %v40 = vld [vmem:[%s1 + $0x70] sm:$0xff]
  %v41 = vld [vmem:[%s1 + $0x78] sm:$0xff]
  %42 = vmatprep.subr.mxu0 0.0
  %43 = vmatpush1.msra.mxu0 %v26
  %44 = vmatprep.subr.mxu0 0.0
  %45 = vmatpush1.msra.mxu0 %v27
  %46 = vmatprep.subr.mxu0 0.0
  %47 = vmatpush1.msra.mxu0 %v28
  %48 = vmatprep.subr.mxu0 0.0
  %49 = vmatpush1.msra.mxu0 %v29
  %50 = vmatprep.subr.mxu0 0.0
  %51 = vmatpush1.msra.mxu0 %v30
  %52 = vmatprep.subr.mxu0 0.0
  %53 = vmatpush1.msra.mxu0 %v31
  %54 = vmatprep.subr.mxu0 0.0
  %55 = vmatpush1.msra.mxu0 %v32
  %56 = vmatprep.subr.mxu0 0.0
  %57 = vmatpush1.msra.mxu0 %v33
  %58 = vmatprep.subr.mxu0 0.0
  %59 = vmatpush1.msra.mxu0 %v34
  %60 = vmatprep.subr.mxu0 0.0
  %61 = vmatpush1.msra.mxu0 %v35
  %62 = vmatprep.subr.mxu0 0.0
  %63 = vmatpush1.msra.mxu0 %v36
  %64 = vmatprep.subr.mxu0 0.0
  %65 = vmatpush1.msra.mxu0 %v37
  %66 = vmatprep.subr.mxu0 0.0
  %67 = vmatpush1.msra.mxu0 %v38
  %68 = vmatprep.subr.mxu0 0.0
  %69 = vmatpush1.msra.mxu0 %v39
  %70 = vmatprep.subr.mxu0 0.0
  %71 = vmatpush1.msra.mxu0 %v40
  %72 = vmatprep.subr.mxu0 0.0
  %73 = vmatpush1.msra.mxu0 %v41
  %74 = vmatprep.subr.mxu0 0.0
  %75 = vmatpush1.msra.mxu0 0.0
  %76 = vmatprep.subr.mxu0 0.0
  %77 = vmatpush1.msra.mxu0 0.0
  %78 = vmatprep.subr.mxu0 0.0
  %79 = vmatpush1.msra.mxu0 0.0
  %80 = vmatprep.subr.mxu0 0.0
  %81 = vmatpush1.msra.mxu0 0.0
  %82 = vmatprep.subr.mxu0 0.0
  %83 = vmatpush1.msra.mxu0 0.0
  %84 = vmatprep.subr.mxu0 0.0
  %85 = vmatpush1.msra.mxu0 0.0
  %86 = vmatprep.subr.mxu0 0.0
  %87 = vmatpush1.msra.mxu0 0.0
  %88 = vmatprep.subr.mxu0 0.0
  %89 = vmatpush1.msra.mxu0 0.0
  %90 = vmatprep.subr.mxu0 0.0
  %91 = vmatpush1.msra.mxu0 0.0
  %92 = vmatprep.subr.mxu0 0.0
  %93 = vmatpush1.msra.mxu0 0.0
  %94 = vmatprep.subr.mxu0 0.0
  %95 = vmatpush1.msra.mxu0 0.0
  %96 = vmatprep.subr.mxu0 0.0
  %97 = vmatpush1.msra.mxu0 0.0
  %98 = vmatprep.subr.mxu0 0.0
  %99 = vmatpush1.msra.mxu0 0.0
  %100 = vmatprep.subr.mxu0 0.0
  %101 = vmatpush1.msra.mxu0 0.0
  %102 = vmatprep.subr.mxu0 0.0
  %103 = vmatpush1.msra.mxu0 0.0
  %104 = vmatprep.subr.mxu0 0.0
  %105 = vmatpush1.msra.mxu0 0.0
  %106 = vmatprep.mubr.f32.mxu0 0.0
  %107 = vmatmul.mubr.f32.gmra.mrb[0].mxu0 %v16
  %v108 = vpop.f32.mrb[0].mxu0
  %v109 = vadd.f32 0.0, %v108
  %v110 = vpop.f32.mrb[0].mxu0
  %111 = vmatprep.mubr.f32.mxu0 0.0
  %112 = vmatmul.mubr.f32.gmra.mrb[0].mxu0 %v17
  %v113 = vpop.f32.mrb[0].mxu0
  %v114 = vadd.f32 0.0, %v113
  %v115 = vpop.f32.mrb[0].mxu0
  %116 = vmatprep.mubr.f32.mxu0 0.0
  %117 = vmatmul.mubr.f32.gmra.mrb[0].mxu0 %v18
  %v118 = vpop.f32.mrb[0].mxu0
  %v119 = vadd.f32 0.0, %v118
  %v120 = vpop.f32.mrb[0].mxu0
  %121 = vmatprep.mubr.f32.mxu0 0.0
  %122 = vmatmul.mubr.f32.gmra.mrb[0].mxu0 %v19
  %v123 = vpop.f32.mrb[0].mxu0
  %v124 = vadd.f32 0.0, %v123
  %v125 = vpop.f32.mrb[0].mxu0
  %126 = vmatprep.mubr.f32.mxu0 0.0
  %127 = vmatmul.mubr.f32.gmra.mrb[0].mxu0 %v20
  %v128 = vpop.f32.mrb[0].mxu0
  %v129 = vadd.f32 0.0, %v128
  %v130 = vpop.f32.mrb[0].mxu0
  %131 = vmatprep.mubr.f32.mxu0 0.0
  %132 = vmatmul.mubr.f32.gmra.mrb[0].mxu0 %v21
  %v133 = vpop.f32.mrb[0].mxu0
  %v134 = vadd.f32 0.0, %v133
  %v135 = vpop.f32.mrb[0].mxu0
  %136 = vmatprep.mubr.f32.mxu0 0.0
  %137 = vmatmul.mubr.f32.gmra.mrb[0].mxu0 %v22
  %v138 = vpop.f32.mrb[0].mxu0
  %v139 = vadd.f32 0.0, %v138
  %v140 = vpop.f32.mrb[0].mxu0
  %141 = vmatprep.mubr.f32.mxu0 0.0
  %142 = vmatmul.mubr.f32.gmra.mrb[0].mxu0 %v23
  %v143 = vpop.f32.mrb[0].mxu0
  %v144 = vadd.f32 0.0, %v143
  %v145 = vpop.f32.mrb[0].mxu0
  %146 = vmatprep.mubr.f32.mxu0 0.0
  %147 = vmatmul.mubr.f32.gmra.mrb[0].mxu0 %v24
  %v148 = vpop.f32.mrb[0].mxu0
  %v149 = vadd.f32 0.0, %v148
  %v150 = vpop.f32.mrb[0].mxu0
  %151 = vmatprep.mubr.f32.mxu0 0.0
  %152 = vmatmul.mubr.f32.gmra.mrb[0].mxu0 %v25
  %v153 = vpop.f32.mrb[0].mxu0
  %v154 = vadd.f32 0.0, %v153
  %v155 = vpop.f32.mrb[0].mxu0
  %156 = vdwg.mxu0
  %v157 = vld [vmem:[%s1 + $0x80] sm:$0xff]
  %v158 = vld [vmem:[%s1 + $0x88] sm:$0xff]
  %v159 = vld [vmem:[%s1 + $0x90] sm:$0xff]
  %v160 = vld [vmem:[%s1 + $0x98] sm:$0xff]
  %vm161 = vcmask 261120
  %v163 = vsel %vm161, 0.0, 0
  %165 = vmatprep.subr.mxu0 0.0
  %166 = vmatpush1.msra.mxu0 %v157
  %167 = vmatprep.subr.mxu0 0.0
  %168 = vmatpush1.msra.mxu0 %v158
  %169 = vmatprep.subr.mxu0 0.0
  %170 = vmatpush1.msra.mxu0 %v159
  %171 = vmatprep.subr.mxu0 0.0
  %172 = vmatpush1.msra.mxu0 %v160
  %173 = vmatprep.subr.mxu0 0.0
  %174 = vmatpush1.msra.mxu0 0.0
  %175 = vmatprep.subr.mxu0 0.0
  %176 = vmatpush1.msra.mxu0 0.0
  %177 = vmatprep.subr.mxu0 0.0
  %178 = vmatpush1.msra.mxu0 0.0
  %179 = vmatprep.subr.mxu0 0.0
  %180 = vmatpush1.msra.mxu0 0.0
  %181 = vmatprep.subr.mxu0 0.0
  %182 = vmatpush1.msra.mxu0 0.0
  %183 = vmatprep.subr.mxu0 0.0
  %184 = vmatpush1.msra.mxu0 0.0
  %185 = vmatprep.subr.mxu0 0.0
  %186 = vmatpush1.msra.mxu0 0.0
  %187 = vmatprep.subr.mxu0 0.0
  %188 = vmatpush1.msra.mxu0 0.0
  %189 = vmatprep.subr.mxu0 0.0
  %190 = vmatpush1.msra.mxu0 0.0
  %191 = vmatprep.subr.mxu0 0.0
  %192 = vmatpush1.msra.mxu0 0.0
  %193 = vmatprep.subr.mxu0 0.0
  %194 = vmatpush1.msra.mxu0 0.0
  %195 = vmatprep.subr.mxu0 0.0
  %196 = vmatpush1.msra.mxu0 0.0
  %197 = vmatprep.subr.mxu0 0.0
  %198 = vmatpush1.msra.mxu0 0.0
  %199 = vmatprep.subr.mxu0 0.0
  %200 = vmatpush1.msra.mxu0 0.0
  %201 = vmatprep.subr.mxu0 0.0
  %202 = vmatpush1.msra.mxu0 0.0
  %203 = vmatprep.subr.mxu0 0.0
  %204 = vmatpush1.msra.mxu0 0.0
  %205 = vmatprep.subr.mxu0 0.0
  %206 = vmatpush1.msra.mxu0 0.0
  %207 = vmatprep.subr.mxu0 0.0
  %208 = vmatpush1.msra.mxu0 0.0
  %209 = vmatprep.subr.mxu0 0.0
  %210 = vmatpush1.msra.mxu0 0.0
  %211 = vmatprep.subr.mxu0 0.0
  %212 = vmatpush1.msra.mxu0 0.0
  %213 = vmatprep.subr.mxu0 0.0
  %214 = vmatpush1.msra.mxu0 0.0
  %215 = vmatprep.subr.mxu0 0.0
  %216 = vmatpush1.msra.mxu0 0.0
  %217 = vmatprep.subr.mxu0 0.0
  %218 = vmatpush1.msra.mxu0 0.0
  %219 = vmatprep.subr.mxu0 0.0
  %220 = vmatpush1.msra.mxu0 0.0
  %221 = vmatprep.subr.mxu0 0.0
  %222 = vmatpush1.msra.mxu0 0.0
  %223 = vmatprep.subr.mxu0 0.0
  %224 = vmatpush1.msra.mxu0 0.0
  %225 = vmatprep.subr.mxu0 0.0
  %226 = vmatpush1.msra.mxu0 0.0
  %227 = vmatprep.subr.mxu0 0.0
  %228 = vmatpush1.msra.mxu0 0.0
  %229 = vmatprep.mubr.f32.mxu0 0.0
  %230 = vmatmul.mubr.f32.gmra.mrb[0].mxu0 %v163
  %v231 = vpop.f32.mrb[0].mxu0
  %v232 = vadd.f32 0.0, %v231
  %v233 = vpop.f32.mrb[0].mxu0
  %234 = vdwg.mxu0
  %v235 = vadd.f32 %v109, %v232
  %v236 = vxor.u32 %v235, 2147483648
  %v237 = vmul.f32 %v236, 1.442695
  %v238 = vpow.pop %v237
  %v239 = vadd.f32 %v238, 1.0
  %v240 = vrcp.pop %v239
  %v241 = vmul.f32 1.0, %v240
  %v242 = vtanh.pop %v235
  %v243 = vmul.f32 %v241, 0.0
  %245 = vrot.lane.b32.xlu0 %v242, 32
  %v246 = vpop.permute.xlu0 %245
  %v248 = vmul.f32 %v241, %v246
  %250 = vrot.lane.b32.xlu0 %v248, 32
  %v251 = vpop.permute.xlu0 %250
  %v253 = vadd.f32 %v243, %v251
  %v254 = vtanh.pop %v253
  %256 = vrot.lane.b32.xlu0 %v254, 32
  %v257 = vpop.permute.xlu0 %256
  %v259 = vmul.f32 %v241, %v257
  %261 = vrot.lane.b32.xlu0 %v259, 64
  %v262 = vpop.permute.xlu0 %261
  %v263 = vsel %vm161, %v262, 0
  %265 = vmatprep.subr.mxu0 0.0
  %266 = vmatpush1.msra.mxu0 %v157
  %267 = vmatprep.subr.mxu0 0.0
  %268 = vmatpush1.msra.mxu0 %v158
  %269 = vmatprep.subr.mxu0 0.0
  %270 = vmatpush1.msra.mxu0 %v159
  %271 = vmatprep.subr.mxu0 0.0
  %272 = vmatpush1.msra.mxu0 %v160
  %273 = vmatprep.subr.mxu0 0.0
  %274 = vmatpush1.msra.mxu0 0.0
  %275 = vmatprep.subr.mxu0 0.0
  %276 = vmatpush1.msra.mxu0 0.0
  %277 = vmatprep.subr.mxu0 0.0
  %278 = vmatpush1.msra.mxu0 0.0
  %279 = vmatprep.subr.mxu0 0.0
  %280 = vmatpush1.msra.mxu0 0.0
  %281 = vmatprep.subr.mxu0 0.0
  %282 = vmatpush1.msra.mxu0 0.0
  %283 = vmatprep.subr.mxu0 0.0
  %284 = vmatpush1.msra.mxu0 0.0
  %285 = vmatprep.subr.mxu0 0.0
  %286 = vmatpush1.msra.mxu0 0.0
  %287 = vmatprep.subr.mxu0 0.0
  %288 = vmatpush1.msra.mxu0 0.0
  %289 = vmatprep.subr.mxu0 0.0
  %290 = vmatpush1.msra.mxu0 0.0
  %291 = vmatprep.subr.mxu0 0.0
  %292 = vmatpush1.msra.mxu0 0.0
  %293 = vmatprep.subr.mxu0 0.0
  %294 = vmatpush1.msra.mxu0 0.0
  %295 = vmatprep.subr.mxu0 0.0
  %296 = vmatpush1.msra.mxu0 0.0
  %297 = vmatprep.subr.mxu0 0.0
  %298 = vmatpush1.msra.mxu0 0.0
  %299 = vmatprep.subr.mxu0 0.0
  %300 = vmatpush1.msra.mxu0 0.0
  %301 = vmatprep.subr.mxu0 0.0
  %302 = vmatpush1.msra.mxu0 0.0
  %303 = vmatprep.subr.mxu0 0.0
  %304 = vmatpush1.msra.mxu0 0.0
  %305 = vmatprep.subr.mxu0 0.0
  %306 = vmatpush1.msra.mxu0 0.0
  %307 = vmatprep.subr.mxu0 0.0
  %308 = vmatpush1.msra.mxu0 0.0
  %309 = vmatprep.subr.mxu0 0.0
  %310 = vmatpush1.msra.mxu0 0.0
  %311 = vmatprep.subr.mxu0 0.0
  %312 = vmatpush1.msra.mxu0 0.0
  %313 = vmatprep.subr.mxu0 0.0
  %314 = vmatpush1.msra.mxu0 0.0
  %315 = vmatprep.subr.mxu0 0.0
  %316 = vmatpush1.msra.mxu0 0.0
  %317 = vmatprep.subr.mxu0 0.0
  %318 = vmatpush1.msra.mxu0 0.0
  %319 = vmatprep.subr.mxu0 0.0
  %320 = vmatpush1.msra.mxu0 0.0
  %321 = vmatprep.subr.mxu0 0.0
  %322 = vmatpush1.msra.mxu0 0.0
  %323 = vmatprep.subr.mxu0 0.0
  %324 = vmatpush1.msra.mxu0 0.0
  %325 = vmatprep.subr.mxu0 0.0
  %326 = vmatpush1.msra.mxu0 0.0
  %327 = vmatprep.subr.mxu0 0.0
  %328 = vmatpush1.msra.mxu0 0.0
  %329 = vmatprep.mubr.f32.mxu0 0.0
  %330 = vmatmul.mubr.f32.gmra.mrb[0].mxu0 %v263
  %v331 = vpop.f32.mrb[0].mxu0
  %v332 = vadd.f32 0.0, %v331
  %v333 = vpop.f32.mrb[0].mxu0
  %334 = vdwg.mxu0
  %v335 = vadd.f32 %v114, %v332
  %v336 = vxor.u32 %v335, 2147483648
  %v337 = vmul.f32 %v336, 1.442695
  %v338 = vpow.pop %v337
  %v339 = vadd.f32 %v338, 1.0
  %v340 = vrcp.pop %v339
  %v341 = vmul.f32 1.0, %v340
  %v342 = vtanh.pop %v335
  %v343 = vmul.f32 %v341, %v253
  %345 = vrot.lane.b32.xlu0 %v342, 32
  %v346 = vpop.permute.xlu0 %345
  %v348 = vmul.f32 %v341, %v346
  %350 = vrot.lane.b32.xlu0 %v348, 32
  %v351 = vpop.permute.xlu0 %350
  %v353 = vadd.f32 %v343, %v351
  %v354 = vtanh.pop %v353
  %356 = vrot.lane.b32.xlu0 %v354, 32
  %v357 = vpop.permute.xlu0 %356
  %v359 = vmul.f32 %v341, %v357
  %361 = vrot.lane.b32.xlu0 %v359, 64
  %v362 = vpop.permute.xlu0 %361
  %v363 = vsel %vm161, %v362, 0
  %365 = vmatprep.subr.mxu0 0.0
  %366 = vmatpush1.msra.mxu0 %v157
  %367 = vmatprep.subr.mxu0 0.0
  %368 = vmatpush1.msra.mxu0 %v158
  %369 = vmatprep.subr.mxu0 0.0
  %370 = vmatpush1.msra.mxu0 %v159
  %371 = vmatprep.subr.mxu0 0.0
  %372 = vmatpush1.msra.mxu0 %v160
  %373 = vmatprep.subr.mxu0 0.0
  %374 = vmatpush1.msra.mxu0 0.0
  %375 = vmatprep.subr.mxu0 0.0
  %376 = vmatpush1.msra.mxu0 0.0
  %377 = vmatprep.subr.mxu0 0.0
  %378 = vmatpush1.msra.mxu0 0.0
  %379 = vmatprep.subr.mxu0 0.0
  %380 = vmatpush1.msra.mxu0 0.0
  %381 = vmatprep.subr.mxu0 0.0
  %382 = vmatpush1.msra.mxu0 0.0
  %383 = vmatprep.subr.mxu0 0.0
  %384 = vmatpush1.msra.mxu0 0.0
  %385 = vmatprep.subr.mxu0 0.0
  %386 = vmatpush1.msra.mxu0 0.0
  %387 = vmatprep.subr.mxu0 0.0
  %388 = vmatpush1.msra.mxu0 0.0
  %389 = vmatprep.subr.mxu0 0.0
  %390 = vmatpush1.msra.mxu0 0.0
  %391 = vmatprep.subr.mxu0 0.0
  %392 = vmatpush1.msra.mxu0 0.0
  %393 = vmatprep.subr.mxu0 0.0
  %394 = vmatpush1.msra.mxu0 0.0
  %395 = vmatprep.subr.mxu0 0.0
  %396 = vmatpush1.msra.mxu0 0.0
  %397 = vmatprep.subr.mxu0 0.0
  %398 = vmatpush1.msra.mxu0 0.0
  %399 = vmatprep.subr.mxu0 0.0
  %400 = vmatpush1.msra.mxu0 0.0
  %401 = vmatprep.subr.mxu0 0.0
  %402 = vmatpush1.msra.mxu0 0.0
  %403 = vmatprep.subr.mxu0 0.0
  %404 = vmatpush1.msra.mxu0 0.0
  %405 = vmatprep.subr.mxu0 0.0
  %406 = vmatpush1.msra.mxu0 0.0
  %407 = vmatprep.subr.mxu0 0.0
  %408 = vmatpush1.msra.mxu0 0.0
  %409 = vmatprep.subr.mxu0 0.0
  %410 = vmatpush1.msra.mxu0 0.0
  %411 = vmatprep.subr.mxu0 0.0
  %412 = vmatpush1.msra.mxu0 0.0
  %413 = vmatprep.subr.mxu0 0.0
  %414 = vmatpush1.msra.mxu0 0.0
  %415 = vmatprep.subr.mxu0 0.0
  %416 = vmatpush1.msra.mxu0 0.0
  %417 = vmatprep.subr.mxu0 0.0
  %418 = vmatpush1.msra.mxu0 0.0
  %419 = vmatprep.subr.mxu0 0.0
  %420 = vmatpush1.msra.mxu0 0.0
  %421 = vmatprep.subr.mxu0 0.0
  %422 = vmatpush1.msra.mxu0 0.0
  %423 = vmatprep.subr.mxu0 0.0
  %424 = vmatpush1.msra.mxu0 0.0
  %425 = vmatprep.subr.mxu0 0.0
  %426 = vmatpush1.msra.mxu0 0.0
  %427 = vmatprep.subr.mxu0 0.0
  %428 = vmatpush1.msra.mxu0 0.0
  %429 = vmatprep.mubr.f32.mxu0 0.0
  %430 = vmatmul.mubr.f32.gmra.mrb[0].mxu0 %v363
  %v431 = vpop.f32.mrb[0].mxu0
  %v432 = vadd.f32 0.0, %v431
  %v433 = vpop.f32.mrb[0].mxu0
  %434 = vdwg.mxu0
  %v435 = vadd.f32 %v119, %v432
  %v436 = vxor.u32 %v435, 2147483648
  %v437 = vmul.f32 %v436, 1.442695
  %v438 = vpow.pop %v437
  %v439 = vadd.f32 %v438, 1.0
  %v440 = vrcp.pop %v439
  %v441 = vmul.f32 1.0, %v440
  %v442 = vtanh.pop %v435
  %v443 = vmul.f32 %v441, %v353
  %445 = vrot.lane.b32.xlu0 %v442, 32
  %v446 = vpop.permute.xlu0 %445
  %v448 = vmul.f32 %v441, %v446
  %450 = vrot.lane.b32.xlu0 %v448, 32
  %v451 = vpop.permute.xlu0 %450
  %v453 = vadd.f32 %v443, %v451
  %v454 = vtanh.pop %v453
  %456 = vrot.lane.b32.xlu0 %v454, 32
  %v457 = vpop.permute.xlu0 %456
  %v459 = vmul.f32 %v441, %v457
  %461 = vrot.lane.b32.xlu0 %v459, 64
  %v462 = vpop.permute.xlu0 %461
  %v463 = vsel %vm161, %v462, 0
  %465 = vmatprep.subr.mxu0 0.0
  %466 = vmatpush1.msra.mxu0 %v157
  %467 = vmatprep.subr.mxu0 0.0
  %468 = vmatpush1.msra.mxu0 %v158
  %469 = vmatprep.subr.mxu0 0.0
  %470 = vmatpush1.msra.mxu0 %v159
  %471 = vmatprep.subr.mxu0 0.0
  %472 = vmatpush1.msra.mxu0 %v160
  %473 = vmatprep.subr.mxu0 0.0
  %474 = vmatpush1.msra.mxu0 0.0
  %475 = vmatprep.subr.mxu0 0.0
  %476 = vmatpush1.msra.mxu0 0.0
  %477 = vmatprep.subr.mxu0 0.0
  %478 = vmatpush1.msra.mxu0 0.0
  %479 = vmatprep.subr.mxu0 0.0
  %480 = vmatpush1.msra.mxu0 0.0
  %481 = vmatprep.subr.mxu0 0.0
  %482 = vmatpush1.msra.mxu0 0.0
  %483 = vmatprep.subr.mxu0 0.0
  %484 = vmatpush1.msra.mxu0 0.0
  %485 = vmatprep.subr.mxu0 0.0
  %486 = vmatpush1.msra.mxu0 0.0
  %487 = vmatprep.subr.mxu0 0.0
  %488 = vmatpush1.msra.mxu0 0.0
  %489 = vmatprep.subr.mxu0 0.0
  %490 = vmatpush1.msra.mxu0 0.0
  %491 = vmatprep.subr.mxu0 0.0
  %492 = vmatpush1.msra.mxu0 0.0
  %493 = vmatprep.subr.mxu0 0.0
  %494 = vmatpush1.msra.mxu0 0.0
  %495 = vmatprep.subr.mxu0 0.0
  %496 = vmatpush1.msra.mxu0 0.0
  %497 = vmatprep.subr.mxu0 0.0
  %498 = vmatpush1.msra.mxu0 0.0
  %499 = vmatprep.subr.mxu0 0.0
  %500 = vmatpush1.msra.mxu0 0.0
  %501 = vmatprep.subr.mxu0 0.0
  %502 = vmatpush1.msra.mxu0 0.0
  %503 = vmatprep.subr.mxu0 0.0
  %504 = vmatpush1.msra.mxu0 0.0
  %505 = vmatprep.subr.mxu0 0.0
  %506 = vmatpush1.msra.mxu0 0.0
  %507 = vmatprep.subr.mxu0 0.0
  %508 = vmatpush1.msra.mxu0 0.0
  %509 = vmatprep.subr.mxu0 0.0
  %510 = vmatpush1.msra.mxu0 0.0
  %511 = vmatprep.subr.mxu0 0.0
  %512 = vmatpush1.msra.mxu0 0.0
  %513 = vmatprep.subr.mxu0 0.0
  %514 = vmatpush1.msra.mxu0 0.0
  %515 = vmatprep.subr.mxu0 0.0
  %516 = vmatpush1.msra.mxu0 0.0
  %517 = vmatprep.subr.mxu0 0.0
  %518 = vmatpush1.msra.mxu0 0.0
  %519 = vmatprep.subr.mxu0 0.0
  %520 = vmatpush1.msra.mxu0 0.0
  %521 = vmatprep.subr.mxu0 0.0
  %522 = vmatpush1.msra.mxu0 0.0
  %523 = vmatprep.subr.mxu0 0.0
  %524 = vmatpush1.msra.mxu0 0.0
  %525 = vmatprep.subr.mxu0 0.0
  %526 = vmatpush1.msra.mxu0 0.0
  %527 = vmatprep.subr.mxu0 0.0
  %528 = vmatpush1.msra.mxu0 0.0
  %529 = vmatprep.mubr.f32.mxu0 0.0
  %530 = vmatmul.mubr.f32.gmra.mrb[0].mxu0 %v463
  %v531 = vpop.f32.mrb[0].mxu0
  %v532 = vadd.f32 0.0, %v531
  %v533 = vpop.f32.mrb[0].mxu0
  %534 = vdwg.mxu0
  %v535 = vadd.f32 %v124, %v532
  %v536 = vxor.u32 %v535, 2147483648
  %v537 = vmul.f32 %v536, 1.442695
  %v538 = vpow.pop %v537
  %v539 = vadd.f32 %v538, 1.0
  %v540 = vrcp.pop %v539
  %v541 = vmul.f32 1.0, %v540
  %v542 = vtanh.pop %v535
  %v543 = vmul.f32 %v541, %v453
  %545 = vrot.lane.b32.xlu0 %v542, 32
  %v546 = vpop.permute.xlu0 %545
  %v548 = vmul.f32 %v541, %v546
  %550 = vrot.lane.b32.xlu0 %v548, 32
  %v551 = vpop.permute.xlu0 %550
  %v553 = vadd.f32 %v543, %v551
  %v554 = vtanh.pop %v553
  %556 = vrot.lane.b32.xlu0 %v554, 32
  %v557 = vpop.permute.xlu0 %556
  %v559 = vmul.f32 %v541, %v557
  %561 = vrot.lane.b32.xlu0 %v559, 64
  %v562 = vpop.permute.xlu0 %561
  %v563 = vsel %vm161, %v562, 0
  %565 = vmatprep.subr.mxu0 0.0
  %566 = vmatpush1.msra.mxu0 %v157
  %567 = vmatprep.subr.mxu0 0.0
  %568 = vmatpush1.msra.mxu0 %v158
  %569 = vmatprep.subr.mxu0 0.0
  %570 = vmatpush1.msra.mxu0 %v159
  %571 = vmatprep.subr.mxu0 0.0
  %572 = vmatpush1.msra.mxu0 %v160
  %573 = vmatprep.subr.mxu0 0.0
  %574 = vmatpush1.msra.mxu0 0.0
  %575 = vmatprep.subr.mxu0 0.0
  %576 = vmatpush1.msra.mxu0 0.0
  %577 = vmatprep.subr.mxu0 0.0
  %578 = vmatpush1.msra.mxu0 0.0
  %579 = vmatprep.subr.mxu0 0.0
  %580 = vmatpush1.msra.mxu0 0.0
  %581 = vmatprep.subr.mxu0 0.0
  %582 = vmatpush1.msra.mxu0 0.0
  %583 = vmatprep.subr.mxu0 0.0
  %584 = vmatpush1.msra.mxu0 0.0
  %585 = vmatprep.subr.mxu0 0.0
  %586 = vmatpush1.msra.mxu0 0.0
  %587 = vmatprep.subr.mxu0 0.0
  %588 = vmatpush1.msra.mxu0 0.0
  %589 = vmatprep.subr.mxu0 0.0
  %590 = vmatpush1.msra.mxu0 0.0
  %591 = vmatprep.subr.mxu0 0.0
  %592 = vmatpush1.msra.mxu0 0.0
  %593 = vmatprep.subr.mxu0 0.0
  %594 = vmatpush1.msra.mxu0 0.0
  %595 = vmatprep.subr.mxu0 0.0
  %596 = vmatpush1.msra.mxu0 0.0
  %597 = vmatprep.subr.mxu0 0.0
  %598 = vmatpush1.msra.mxu0 0.0
  %599 = vmatprep.subr.mxu0 0.0
  %600 = vmatpush1.msra.mxu0 0.0
  %601 = vmatprep.subr.mxu0 0.0
  %602 = vmatpush1.msra.mxu0 0.0
  %603 = vmatprep.subr.mxu0 0.0
  %604 = vmatpush1.msra.mxu0 0.0
  %605 = vmatprep.subr.mxu0 0.0
  %606 = vmatpush1.msra.mxu0 0.0
  %607 = vmatprep.subr.mxu0 0.0
  %608 = vmatpush1.msra.mxu0 0.0
  %609 = vmatprep.subr.mxu0 0.0
  %610 = vmatpush1.msra.mxu0 0.0
  %611 = vmatprep.subr.mxu0 0.0
  %612 = vmatpush1.msra.mxu0 0.0
  %613 = vmatprep.subr.mxu0 0.0
  %614 = vmatpush1.msra.mxu0 0.0
  %615 = vmatprep.subr.mxu0 0.0
  %616 = vmatpush1.msra.mxu0 0.0
  %617 = vmatprep.subr.mxu0 0.0
  %618 = vmatpush1.msra.mxu0 0.0
  %619 = vmatprep.subr.mxu0 0.0
  %620 = vmatpush1.msra.mxu0 0.0
  %621 = vmatprep.subr.mxu0 0.0
  %622 = vmatpush1.msra.mxu0 0.0
  %623 = vmatprep.subr.mxu0 0.0
  %624 = vmatpush1.msra.mxu0 0.0
  %625 = vmatprep.subr.mxu0 0.0
  %626 = vmatpush1.msra.mxu0 0.0
  %627 = vmatprep.subr.mxu0 0.0
  %628 = vmatpush1.msra.mxu0 0.0
  %629 = vmatprep.mubr.f32.mxu0 0.0
  %630 = vmatmul.mubr.f32.gmra.mrb[0].mxu0 %v563
  %v631 = vpop.f32.mrb[0].mxu0
  %v632 = vadd.f32 0.0, %v631
  %v633 = vpop.f32.mrb[0].mxu0
  %634 = vdwg.mxu0
  %v635 = vadd.f32 %v129, %v632
  %v636 = vxor.u32 %v635, 2147483648
  %v637 = vmul.f32 %v636, 1.442695
  %v638 = vpow.pop %v637
  %v639 = vadd.f32 %v638, 1.0
  %v640 = vrcp.pop %v639
  %v641 = vmul.f32 1.0, %v640
  %v642 = vtanh.pop %v635
  %v643 = vmul.f32 %v641, %v553
  %645 = vrot.lane.b32.xlu0 %v642, 32
  %v646 = vpop.permute.xlu0 %645
  %v648 = vmul.f32 %v641, %v646
  %650 = vrot.lane.b32.xlu0 %v648, 32
  %v651 = vpop.permute.xlu0 %650
  %v653 = vadd.f32 %v643, %v651
  %v654 = vtanh.pop %v653
  %656 = vrot.lane.b32.xlu0 %v654, 32
  %v657 = vpop.permute.xlu0 %656
  %v659 = vmul.f32 %v641, %v657
  %661 = vrot.lane.b32.xlu0 %v659, 64
  %v662 = vpop.permute.xlu0 %661
  %v663 = vsel %vm161, %v662, 0
  %665 = vmatprep.subr.mxu0 0.0
  %666 = vmatpush1.msra.mxu0 %v157
  %667 = vmatprep.subr.mxu0 0.0
  %668 = vmatpush1.msra.mxu0 %v158
  %669 = vmatprep.subr.mxu0 0.0
  %670 = vmatpush1.msra.mxu0 %v159
  %671 = vmatprep.subr.mxu0 0.0
  %672 = vmatpush1.msra.mxu0 %v160
  %673 = vmatprep.subr.mxu0 0.0
  %674 = vmatpush1.msra.mxu0 0.0
  %675 = vmatprep.subr.mxu0 0.0
  %676 = vmatpush1.msra.mxu0 0.0
  %677 = vmatprep.subr.mxu0 0.0
  %678 = vmatpush1.msra.mxu0 0.0
  %679 = vmatprep.subr.mxu0 0.0
  %680 = vmatpush1.msra.mxu0 0.0
  %681 = vmatprep.subr.mxu0 0.0
  %682 = vmatpush1.msra.mxu0 0.0
  %683 = vmatprep.subr.mxu0 0.0
  %684 = vmatpush1.msra.mxu0 0.0
  %685 = vmatprep.subr.mxu0 0.0
  %686 = vmatpush1.msra.mxu0 0.0
  %687 = vmatprep.subr.mxu0 0.0
  %688 = vmatpush1.msra.mxu0 0.0
  %689 = vmatprep.subr.mxu0 0.0
  %690 = vmatpush1.msra.mxu0 0.0
  %691 = vmatprep.subr.mxu0 0.0
  %692 = vmatpush1.msra.mxu0 0.0
  %693 = vmatprep.subr.mxu0 0.0
  %694 = vmatpush1.msra.mxu0 0.0
  %695 = vmatprep.subr.mxu0 0.0
  %696 = vmatpush1.msra.mxu0 0.0
  %697 = vmatprep.subr.mxu0 0.0
  %698 = vmatpush1.msra.mxu0 0.0
  %699 = vmatprep.subr.mxu0 0.0
  %700 = vmatpush1.msra.mxu0 0.0
  %701 = vmatprep.subr.mxu0 0.0
  %702 = vmatpush1.msra.mxu0 0.0
  %703 = vmatprep.subr.mxu0 0.0
  %704 = vmatpush1.msra.mxu0 0.0
  %705 = vmatprep.subr.mxu0 0.0
  %706 = vmatpush1.msra.mxu0 0.0
  %707 = vmatprep.subr.mxu0 0.0
  %708 = vmatpush1.msra.mxu0 0.0
  %709 = vmatprep.subr.mxu0 0.0
  %710 = vmatpush1.msra.mxu0 0.0
  %711 = vmatprep.subr.mxu0 0.0
  %712 = vmatpush1.msra.mxu0 0.0
  %713 = vmatprep.subr.mxu0 0.0
  %714 = vmatpush1.msra.mxu0 0.0
  %715 = vmatprep.subr.mxu0 0.0
  %716 = vmatpush1.msra.mxu0 0.0
  %717 = vmatprep.subr.mxu0 0.0
  %718 = vmatpush1.msra.mxu0 0.0
  %719 = vmatprep.subr.mxu0 0.0
  %720 = vmatpush1.msra.mxu0 0.0
  %721 = vmatprep.subr.mxu0 0.0
  %722 = vmatpush1.msra.mxu0 0.0
  %723 = vmatprep.subr.mxu0 0.0
  %724 = vmatpush1.msra.mxu0 0.0
  %725 = vmatprep.subr.mxu0 0.0
  %726 = vmatpush1.msra.mxu0 0.0
  %727 = vmatprep.subr.mxu0 0.0
  %728 = vmatpush1.msra.mxu0 0.0
  %729 = vmatprep.mubr.f32.mxu0 0.0
  %730 = vmatmul.mubr.f32.gmra.mrb[0].mxu0 %v663
  %v731 = vpop.f32.mrb[0].mxu0
  %v732 = vadd.f32 0.0, %v731
  %v733 = vpop.f32.mrb[0].mxu0
  %734 = vdwg.mxu0
  %v735 = vadd.f32 %v134, %v732
  %v736 = vxor.u32 %v735, 2147483648
  %v737 = vmul.f32 %v736, 1.442695
  %v738 = vpow.pop %v737
  %v739 = vadd.f32 %v738, 1.0
  %v740 = vrcp.pop %v739
  %v741 = vmul.f32 1.0, %v740
  %v742 = vtanh.pop %v735
  %v743 = vmul.f32 %v741, %v653
  %745 = vrot.lane.b32.xlu0 %v742, 32
  %v746 = vpop.permute.xlu0 %745
  %v748 = vmul.f32 %v741, %v746
  %750 = vrot.lane.b32.xlu0 %v748, 32
  %v751 = vpop.permute.xlu0 %750
  %v753 = vadd.f32 %v743, %v751
  %v754 = vtanh.pop %v753
  %756 = vrot.lane.b32.xlu0 %v754, 32
  %v757 = vpop.permute.xlu0 %756
  %v759 = vmul.f32 %v741, %v757
  %761 = vrot.lane.b32.xlu0 %v759, 64
  %v762 = vpop.permute.xlu0 %761
  %v763 = vsel %vm161, %v762, 0
  %765 = vmatprep.subr.mxu0 0.0
  %766 = vmatpush1.msra.mxu0 %v157
  %767 = vmatprep.subr.mxu0 0.0
  %768 = vmatpush1.msra.mxu0 %v158
  %769 = vmatprep.subr.mxu0 0.0
  %770 = vmatpush1.msra.mxu0 %v159
  %771 = vmatprep.subr.mxu0 0.0
  %772 = vmatpush1.msra.mxu0 %v160
  %773 = vmatprep.subr.mxu0 0.0
  %774 = vmatpush1.msra.mxu0 0.0
  %775 = vmatprep.subr.mxu0 0.0
  %776 = vmatpush1.msra.mxu0 0.0
  %777 = vmatprep.subr.mxu0 0.0
  %778 = vmatpush1.msra.mxu0 0.0
  %779 = vmatprep.subr.mxu0 0.0
  %780 = vmatpush1.msra.mxu0 0.0
  %781 = vmatprep.subr.mxu0 0.0
  %782 = vmatpush1.msra.mxu0 0.0
  %783 = vmatprep.subr.mxu0 0.0
  %784 = vmatpush1.msra.mxu0 0.0
  %785 = vmatprep.subr.mxu0 0.0
  %786 = vmatpush1.msra.mxu0 0.0
  %787 = vmatprep.subr.mxu0 0.0
  %788 = vmatpush1.msra.mxu0 0.0
  %789 = vmatprep.subr.mxu0 0.0
  %790 = vmatpush1.msra.mxu0 0.0
  %791 = vmatprep.subr.mxu0 0.0
  %792 = vmatpush1.msra.mxu0 0.0
  %793 = vmatprep.subr.mxu0 0.0
  %794 = vmatpush1.msra.mxu0 0.0
  %795 = vmatprep.subr.mxu0 0.0
  %796 = vmatpush1.msra.mxu0 0.0
  %797 = vmatprep.subr.mxu0 0.0
  %798 = vmatpush1.msra.mxu0 0.0
  %799 = vmatprep.subr.mxu0 0.0
  %800 = vmatpush1.msra.mxu0 0.0
  %801 = vmatprep.subr.mxu0 0.0
  %802 = vmatpush1.msra.mxu0 0.0
  %803 = vmatprep.subr.mxu0 0.0
  %804 = vmatpush1.msra.mxu0 0.0
  %805 = vmatprep.subr.mxu0 0.0
  %806 = vmatpush1.msra.mxu0 0.0
  %807 = vmatprep.subr.mxu0 0.0
  %808 = vmatpush1.msra.mxu0 0.0
  %809 = vmatprep.subr.mxu0 0.0
  %810 = vmatpush1.msra.mxu0 0.0
  %811 = vmatprep.subr.mxu0 0.0
  %812 = vmatpush1.msra.mxu0 0.0
  %813 = vmatprep.subr.mxu0 0.0
  %814 = vmatpush1.msra.mxu0 0.0
  %815 = vmatprep.subr.mxu0 0.0
  %816 = vmatpush1.msra.mxu0 0.0
  %817 = vmatprep.subr.mxu0 0.0
  %818 = vmatpush1.msra.mxu0 0.0
  %819 = vmatprep.subr.mxu0 0.0
  %820 = vmatpush1.msra.mxu0 0.0
  %821 = vmatprep.subr.mxu0 0.0
  %822 = vmatpush1.msra.mxu0 0.0
  %823 = vmatprep.subr.mxu0 0.0
  %824 = vmatpush1.msra.mxu0 0.0
  %825 = vmatprep.subr.mxu0 0.0
  %826 = vmatpush1.msra.mxu0 0.0
  %827 = vmatprep.subr.mxu0 0.0
  %828 = vmatpush1.msra.mxu0 0.0
  %829 = vmatprep.mubr.f32.mxu0 0.0
  %830 = vmatmul.mubr.f32.gmra.mrb[0].mxu0 %v763
  %v831 = vpop.f32.mrb[0].mxu0
  %v832 = vadd.f32 0.0, %v831
  %v833 = vpop.f32.mrb[0].mxu0
  %834 = vdwg.mxu0
  %v835 = vadd.f32 %v139, %v832
  %v836 = vxor.u32 %v835, 2147483648
  %v837 = vmul.f32 %v836, 1.442695
  %v838 = vpow.pop %v837
  %v839 = vadd.f32 %v838, 1.0
  %v840 = vrcp.pop %v839
  %v841 = vmul.f32 1.0, %v840
  %v842 = vtanh.pop %v835
  %v843 = vmul.f32 %v841, %v753
  %845 = vrot.lane.b32.xlu0 %v842, 32
  %v846 = vpop.permute.xlu0 %845
  %v848 = vmul.f32 %v841, %v846
  %850 = vrot.lane.b32.xlu0 %v848, 32
  %v851 = vpop.permute.xlu0 %850
  %v853 = vadd.f32 %v843, %v851
  %v854 = vtanh.pop %v853
  %856 = vrot.lane.b32.xlu0 %v854, 32
  %v857 = vpop.permute.xlu0 %856
  %v859 = vmul.f32 %v841, %v857
  %861 = vrot.lane.b32.xlu0 %v859, 64
  %v862 = vpop.permute.xlu0 %861
  %v863 = vsel %vm161, %v862, 0
  %865 = vmatprep.subr.mxu0 0.0
  %866 = vmatpush1.msra.mxu0 %v157
  %867 = vmatprep.subr.mxu0 0.0
  %868 = vmatpush1.msra.mxu0 %v158
  %869 = vmatprep.subr.mxu0 0.0
  %870 = vmatpush1.msra.mxu0 %v159
  %871 = vmatprep.subr.mxu0 0.0
  %872 = vmatpush1.msra.mxu0 %v160
  %873 = vmatprep.subr.mxu0 0.0
  %874 = vmatpush1.msra.mxu0 0.0
  %875 = vmatprep.subr.mxu0 0.0
  %876 = vmatpush1.msra.mxu0 0.0
  %877 = vmatprep.subr.mxu0 0.0
  %878 = vmatpush1.msra.mxu0 0.0
  %879 = vmatprep.subr.mxu0 0.0
  %880 = vmatpush1.msra.mxu0 0.0
  %881 = vmatprep.subr.mxu0 0.0
  %882 = vmatpush1.msra.mxu0 0.0
  %883 = vmatprep.subr.mxu0 0.0
  %884 = vmatpush1.msra.mxu0 0.0
  %885 = vmatprep.subr.mxu0 0.0
  %886 = vmatpush1.msra.mxu0 0.0
  %887 = vmatprep.subr.mxu0 0.0
  %888 = vmatpush1.msra.mxu0 0.0
  %889 = vmatprep.subr.mxu0 0.0
  %890 = vmatpush1.msra.mxu0 0.0
  %891 = vmatprep.subr.mxu0 0.0
  %892 = vmatpush1.msra.mxu0 0.0
  %893 = vmatprep.subr.mxu0 0.0
  %894 = vmatpush1.msra.mxu0 0.0
  %895 = vmatprep.subr.mxu0 0.0
  %896 = vmatpush1.msra.mxu0 0.0
  %897 = vmatprep.subr.mxu0 0.0
  %898 = vmatpush1.msra.mxu0 0.0
  %899 = vmatprep.subr.mxu0 0.0
  %900 = vmatpush1.msra.mxu0 0.0
  %901 = vmatprep.subr.mxu0 0.0
  %902 = vmatpush1.msra.mxu0 0.0
  %903 = vmatprep.subr.mxu0 0.0
  %904 = vmatpush1.msra.mxu0 0.0
  %905 = vmatprep.subr.mxu0 0.0
  %906 = vmatpush1.msra.mxu0 0.0
  %907 = vmatprep.subr.mxu0 0.0
  %908 = vmatpush1.msra.mxu0 0.0
  %909 = vmatprep.subr.mxu0 0.0
  %910 = vmatpush1.msra.mxu0 0.0
  %911 = vmatprep.subr.mxu0 0.0
  %912 = vmatpush1.msra.mxu0 0.0
  %913 = vmatprep.subr.mxu0 0.0
  %914 = vmatpush1.msra.mxu0 0.0
  %915 = vmatprep.subr.mxu0 0.0
  %916 = vmatpush1.msra.mxu0 0.0
  %917 = vmatprep.subr.mxu0 0.0
  %918 = vmatpush1.msra.mxu0 0.0
  %919 = vmatprep.subr.mxu0 0.0
  %920 = vmatpush1.msra.mxu0 0.0
  %921 = vmatprep.subr.mxu0 0.0
  %922 = vmatpush1.msra.mxu0 0.0
  %923 = vmatprep.subr.mxu0 0.0
  %924 = vmatpush1.msra.mxu0 0.0
  %925 = vmatprep.subr.mxu0 0.0
  %926 = vmatpush1.msra.mxu0 0.0
  %927 = vmatprep.subr.mxu0 0.0
  %928 = vmatpush1.msra.mxu0 0.0
  %929 = vmatprep.mubr.f32.mxu0 0.0
  %930 = vmatmul.mubr.f32.gmra.mrb[0].mxu0 %v863
  %v931 = vpop.f32.mrb[0].mxu0
  %v932 = vadd.f32 0.0, %v931
  %v933 = vpop.f32.mrb[0].mxu0
  %934 = vdwg.mxu0
  %v935 = vadd.f32 %v144, %v932
  %v936 = vxor.u32 %v935, 2147483648
  %v937 = vmul.f32 %v936, 1.442695
  %v938 = vpow.pop %v937
  %v939 = vadd.f32 %v938, 1.0
  %v940 = vrcp.pop %v939
  %v941 = vmul.f32 1.0, %v940
  %v942 = vtanh.pop %v935
  %v943 = vmul.f32 %v941, %v853
  %945 = vrot.lane.b32.xlu0 %v942, 32
  %v946 = vpop.permute.xlu0 %945
  %v948 = vmul.f32 %v941, %v946
  %950 = vrot.lane.b32.xlu0 %v948, 32
  %v951 = vpop.permute.xlu0 %950
  %v953 = vadd.f32 %v943, %v951
  %v954 = vtanh.pop %v953
  %956 = vrot.lane.b32.xlu0 %v954, 32
  %v957 = vpop.permute.xlu0 %956
  %v959 = vmul.f32 %v941, %v957
  %961 = vrot.lane.b32.xlu0 %v959, 64
  %v962 = vpop.permute.xlu0 %961
  %v963 = vsel %vm161, %v962, 0
  %965 = vmatprep.subr.mxu0 0.0
  %966 = vmatpush1.msra.mxu0 %v157
  %967 = vmatprep.subr.mxu0 0.0
  %968 = vmatpush1.msra.mxu0 %v158
  %969 = vmatprep.subr.mxu0 0.0
  %970 = vmatpush1.msra.mxu0 %v159
  %971 = vmatprep.subr.mxu0 0.0
  %972 = vmatpush1.msra.mxu0 %v160
  %973 = vmatprep.subr.mxu0 0.0
  %974 = vmatpush1.msra.mxu0 0.0
  %975 = vmatprep.subr.mxu0 0.0
  %976 = vmatpush1.msra.mxu0 0.0
  %977 = vmatprep.subr.mxu0 0.0
  %978 = vmatpush1.msra.mxu0 0.0
  %979 = vmatprep.subr.mxu0 0.0
  %980 = vmatpush1.msra.mxu0 0.0
  %981 = vmatprep.subr.mxu0 0.0
  %982 = vmatpush1.msra.mxu0 0.0
  %983 = vmatprep.subr.mxu0 0.0
  %984 = vmatpush1.msra.mxu0 0.0
  %985 = vmatprep.subr.mxu0 0.0
  %986 = vmatpush1.msra.mxu0 0.0
  %987 = vmatprep.subr.mxu0 0.0
  %988 = vmatpush1.msra.mxu0 0.0
  %989 = vmatprep.subr.mxu0 0.0
  %990 = vmatpush1.msra.mxu0 0.0
  %991 = vmatprep.subr.mxu0 0.0
  %992 = vmatpush1.msra.mxu0 0.0
  %993 = vmatprep.subr.mxu0 0.0
  %994 = vmatpush1.msra.mxu0 0.0
  %995 = vmatprep.subr.mxu0 0.0
  %996 = vmatpush1.msra.mxu0 0.0
  %997 = vmatprep.subr.mxu0 0.0
  %998 = vmatpush1.msra.mxu0 0.0
  %999 = vmatprep.subr.mxu0 0.0
  %1000 = vmatpush1.msra.mxu0 0.0
  %1001 = vmatprep.subr.mxu0 0.0
  %1002 = vmatpush1.msra.mxu0 0.0
  %1003 = vmatprep.subr.mxu0 0.0
  %1004 = vmatpush1.msra.mxu0 0.0
  %1005 = vmatprep.subr.mxu0 0.0
  %1006 = vmatpush1.msra.mxu0 0.0
  %1007 = vmatprep.subr.mxu0 0.0
  %1008 = vmatpush1.msra.mxu0 0.0
  %1009 = vmatprep.subr.mxu0 0.0
  %1010 = vmatpush1.msra.mxu0 0.0
  %1011 = vmatprep.subr.mxu0 0.0
  %1012 = vmatpush1.msra.mxu0 0.0
  %1013 = vmatprep.subr.mxu0 0.0
  %1014 = vmatpush1.msra.mxu0 0.0
  %1015 = vmatprep.subr.mxu0 0.0
  %1016 = vmatpush1.msra.mxu0 0.0
  %1017 = vmatprep.subr.mxu0 0.0
  %1018 = vmatpush1.msra.mxu0 0.0
  %1019 = vmatprep.subr.mxu0 0.0
  %1020 = vmatpush1.msra.mxu0 0.0
  %1021 = vmatprep.subr.mxu0 0.0
  %1022 = vmatpush1.msra.mxu0 0.0
  %1023 = vmatprep.subr.mxu0 0.0
  %1024 = vmatpush1.msra.mxu0 0.0
  %1025 = vmatprep.subr.mxu0 0.0
  %1026 = vmatpush1.msra.mxu0 0.0
  %1027 = vmatprep.subr.mxu0 0.0
  %1028 = vmatpush1.msra.mxu0 0.0
  %1029 = vmatprep.mubr.f32.mxu0 0.0
  %1030 = vmatmul.mubr.f32.gmra.mrb[0].mxu0 %v963
  %v1031 = vpop.f32.mrb[0].mxu0
  %v1032 = vadd.f32 0.0, %v1031
  %v1033 = vpop.f32.mrb[0].mxu0
  %1034 = vdwg.mxu0
  %v1035 = vadd.f32 %v149, %v1032
  %v1036 = vxor.u32 %v1035, 2147483648
  %v1037 = vmul.f32 %v1036, 1.442695
  %v1038 = vpow.pop %v1037
  %v1039 = vadd.f32 %v1038, 1.0
  %v1040 = vrcp.pop %v1039
  %v1041 = vmul.f32 1.0, %v1040
  %v1042 = vtanh.pop %v1035
  %v1043 = vmul.f32 %v1041, %v953
  %1045 = vrot.lane.b32.xlu0 %v1042, 32
  %v1046 = vpop.permute.xlu0 %1045
  %v1048 = vmul.f32 %v1041, %v1046
  %1050 = vrot.lane.b32.xlu0 %v1048, 32
  %v1051 = vpop.permute.xlu0 %1050
  %v1053 = vadd.f32 %v1043, %v1051
  %v1054 = vtanh.pop %v1053
  %1056 = vrot.lane.b32.xlu0 %v1054, 32
  %v1057 = vpop.permute.xlu0 %1056
  %v1059 = vmul.f32 %v1041, %v1057
  %1061 = vrot.lane.b32.xlu0 %v1059, 64
  %v1062 = vpop.permute.xlu0 %1061
  %v1063 = vsel %vm161, %v1062, 0
  %1065 = vmatprep.subr.mxu0 0.0
  %1066 = vmatpush1.msra.mxu0 %v157
  %1067 = vmatprep.subr.mxu0 0.0
  %1068 = vmatpush1.msra.mxu0 %v158
  %1069 = vmatprep.subr.mxu0 0.0
  %1070 = vmatpush1.msra.mxu0 %v159
  %1071 = vmatprep.subr.mxu0 0.0
  %1072 = vmatpush1.msra.mxu0 %v160
  %1073 = vmatprep.subr.mxu0 0.0
  %1074 = vmatpush1.msra.mxu0 0.0
  %1075 = vmatprep.subr.mxu0 0.0
  %1076 = vmatpush1.msra.mxu0 0.0
  %1077 = vmatprep.subr.mxu0 0.0
  %1078 = vmatpush1.msra.mxu0 0.0
  %1079 = vmatprep.subr.mxu0 0.0
  %1080 = vmatpush1.msra.mxu0 0.0
  %1081 = vmatprep.subr.mxu0 0.0
  %1082 = vmatpush1.msra.mxu0 0.0
  %1083 = vmatprep.subr.mxu0 0.0
  %1084 = vmatpush1.msra.mxu0 0.0
  %1085 = vmatprep.subr.mxu0 0.0
  %1086 = vmatpush1.msra.mxu0 0.0
  %1087 = vmatprep.subr.mxu0 0.0
  %1088 = vmatpush1.msra.mxu0 0.0
  %1089 = vmatprep.subr.mxu0 0.0
  %1090 = vmatpush1.msra.mxu0 0.0
  %1091 = vmatprep.subr.mxu0 0.0
  %1092 = vmatpush1.msra.mxu0 0.0
  %1093 = vmatprep.subr.mxu0 0.0
  %1094 = vmatpush1.msra.mxu0 0.0
  %1095 = vmatprep.subr.mxu0 0.0
  %1096 = vmatpush1.msra.mxu0 0.0
  %1097 = vmatprep.subr.mxu0 0.0
  %1098 = vmatpush1.msra.mxu0 0.0
  %1099 = vmatprep.subr.mxu0 0.0
  %1100 = vmatpush1.msra.mxu0 0.0
  %1101 = vmatprep.subr.mxu0 0.0
  %1102 = vmatpush1.msra.mxu0 0.0
  %1103 = vmatprep.subr.mxu0 0.0
  %1104 = vmatpush1.msra.mxu0 0.0
  %1105 = vmatprep.subr.mxu0 0.0
  %1106 = vmatpush1.msra.mxu0 0.0
  %1107 = vmatprep.subr.mxu0 0.0
  %1108 = vmatpush1.msra.mxu0 0.0
  %1109 = vmatprep.subr.mxu0 0.0
  %1110 = vmatpush1.msra.mxu0 0.0
  %1111 = vmatprep.subr.mxu0 0.0
  %1112 = vmatpush1.msra.mxu0 0.0
  %1113 = vmatprep.subr.mxu0 0.0
  %1114 = vmatpush1.msra.mxu0 0.0
  %1115 = vmatprep.subr.mxu0 0.0
  %1116 = vmatpush1.msra.mxu0 0.0
  %1117 = vmatprep.subr.mxu0 0.0
  %1118 = vmatpush1.msra.mxu0 0.0
  %1119 = vmatprep.subr.mxu0 0.0
  %1120 = vmatpush1.msra.mxu0 0.0
  %1121 = vmatprep.subr.mxu0 0.0
  %1122 = vmatpush1.msra.mxu0 0.0
  %1123 = vmatprep.subr.mxu0 0.0
  %1124 = vmatpush1.msra.mxu0 0.0
  %1125 = vmatprep.subr.mxu0 0.0
  %1126 = vmatpush1.msra.mxu0 0.0
  %1127 = vmatprep.subr.mxu0 0.0
  %1128 = vmatpush1.msra.mxu0 0.0
  %1129 = vmatprep.mubr.f32.mxu0 0.0
  %1130 = vmatmul.mubr.f32.gmra.mrb[0].mxu0 %v1063
  %v1131 = vpop.f32.mrb[0].mxu0
  %v1132 = vadd.f32 0.0, %v1131
  %v1133 = vpop.f32.mrb[0].mxu0
  %1134 = vdwg.mxu0
  %v1135 = vadd.f32 %v154, %v1132
  %v1136 = vxor.u32 %v1135, 2147483648
  %v1137 = vmul.f32 %v1136, 1.442695
  %v1138 = vpow.pop %v1137
  %v1139 = vadd.f32 %v1138, 1.0
  %v1140 = vrcp.pop %v1139
  %v1141 = vmul.f32 1.0, %v1140
  %v1142 = vtanh.pop %v1135
  %v1143 = vmul.f32 %v1141, %v1053
  %1145 = vrot.lane.b32.xlu0 %v1142, 32
  %v1146 = vpop.permute.xlu0 %1145
  %v1148 = vmul.f32 %v1141, %v1146
  %1150 = vrot.lane.b32.xlu0 %v1148, 32
  %v1151 = vpop.permute.xlu0 %1150
  %v1153 = vadd.f32 %v1143, %v1151
  %v1154 = vtanh.pop %v1153
  %1156 = vrot.lane.b32.xlu0 %v1154, 32
  %v1157 = vpop.permute.xlu0 %1156
  %v1159 = vmul.f32 %v1141, %v1157
  %v1160 = vld [vmem:[%s2] sm:$0xff]
  %v1161 = vld [vmem:[%s2 + $0x8] sm:$0xff]
  %v1162 = vld [vmem:[%s2 + $0x10] sm:$0xff]
  %v1163 = vld [vmem:[%s2 + $0x18] sm:$0xff]
  %v1164 = vld [vmem:[%s2 + $0x20] sm:$0x1]
  %v1165 = vlaneseq
  %v1166 = vshrl.u32 %v1165, 7
  %v1167 = vsub.s32 0, %v1166
  %v1168 = vrot.slane %v1164, %v1167
  %1170 = vrot.lane.b32.xlu0 %v1159, 64
  %v1171 = vpop.permute.xlu0 %1170
  %v1172 = vsel %vm161, %v1171, 0
  %1174 = vmatprep.subr.mxu0 0.0
  %1175 = vmatpush1.msra.mxu0 %v1160
  %1176 = vmatprep.subr.mxu0 0.0
  %1177 = vmatpush1.msra.mxu0 %v1161
  %1178 = vmatprep.subr.mxu0 0.0
  %1179 = vmatpush1.msra.mxu0 %v1162
  %1180 = vmatprep.subr.mxu0 0.0
  %1181 = vmatpush1.msra.mxu0 %v1163
  %1182 = vmatprep.subr.mxu0 0.0
  %1183 = vmatpush1.msra.mxu0 0.0
  %1184 = vmatprep.subr.mxu0 0.0
  %1185 = vmatpush1.msra.mxu0 0.0
  %1186 = vmatprep.subr.mxu0 0.0
  %1187 = vmatpush1.msra.mxu0 0.0
  %1188 = vmatprep.subr.mxu0 0.0
  %1189 = vmatpush1.msra.mxu0 0.0
  %1190 = vmatprep.subr.mxu0 0.0
  %1191 = vmatpush1.msra.mxu0 0.0
  %1192 = vmatprep.subr.mxu0 0.0
  %1193 = vmatpush1.msra.mxu0 0.0
  %1194 = vmatprep.subr.mxu0 0.0
  %1195 = vmatpush1.msra.mxu0 0.0
  %1196 = vmatprep.subr.mxu0 0.0
  %1197 = vmatpush1.msra.mxu0 0.0
  %1198 = vmatprep.subr.mxu0 0.0
  %1199 = vmatpush1.msra.mxu0 0.0
  %1200 = vmatprep.subr.mxu0 0.0
  %1201 = vmatpush1.msra.mxu0 0.0
  %1202 = vmatprep.subr.mxu0 0.0
  %1203 = vmatpush1.msra.mxu0 0.0
  %1204 = vmatprep.subr.mxu0 0.0
  %1205 = vmatpush1.msra.mxu0 0.0
  %1206 = vmatprep.subr.mxu0 0.0
  %1207 = vmatpush1.msra.mxu0 0.0
  %1208 = vmatprep.subr.mxu0 0.0
  %1209 = vmatpush1.msra.mxu0 0.0
  %1210 = vmatprep.subr.mxu0 0.0
  %1211 = vmatpush1.msra.mxu0 0.0
  %1212 = vmatprep.subr.mxu0 0.0
  %1213 = vmatpush1.msra.mxu0 0.0
  %1214 = vmatprep.subr.mxu0 0.0
  %1215 = vmatpush1.msra.mxu0 0.0
  %1216 = vmatprep.subr.mxu0 0.0
  %1217 = vmatpush1.msra.mxu0 0.0
  %1218 = vmatprep.subr.mxu0 0.0
  %1219 = vmatpush1.msra.mxu0 0.0
  %1220 = vmatprep.subr.mxu0 0.0
  %1221 = vmatpush1.msra.mxu0 0.0
  %1222 = vmatprep.subr.mxu0 0.0
  %1223 = vmatpush1.msra.mxu0 0.0
  %1224 = vmatprep.subr.mxu0 0.0
  %1225 = vmatpush1.msra.mxu0 0.0
  %1226 = vmatprep.subr.mxu0 0.0
  %1227 = vmatpush1.msra.mxu0 0.0
  %1228 = vmatprep.subr.mxu0 0.0
  %1229 = vmatpush1.msra.mxu0 0.0
  %1230 = vmatprep.subr.mxu0 0.0
  %1231 = vmatpush1.msra.mxu0 0.0
  %1232 = vmatprep.subr.mxu0 0.0
  %1233 = vmatpush1.msra.mxu0 0.0
  %1234 = vmatprep.subr.mxu0 0.0
  %1235 = vmatpush1.msra.mxu0 0.0
  %1236 = vmatprep.subr.mxu0 0.0
  %1237 = vmatpush1.msra.mxu0 0.0
  %1238 = vmatprep.mubr.f32.mxu0 0.0
  %1239 = vmatmul.mubr.f32.gmra.mrb[0].mxu0 %v263
  %v1240 = vpop.f32.mrb[0].mxu0
  %v1241 = vadd.f32 %v1168, %v1240
  %v1242 = vpop.f32.mrb[0].mxu0
  %1243 = vmatprep.mubr.f32.mxu0 0.0
  %1244 = vmatmul.mubr.f32.gmra.mrb[0].mxu0 %v363
  %v1245 = vpop.f32.mrb[0].mxu0
  %v1246 = vadd.f32 %v1168, %v1245
  %v1247 = vpop.f32.mrb[0].mxu0
  %1248 = vmatprep.mubr.f32.mxu0 0.0
  %1249 = vmatmul.mubr.f32.gmra.mrb[0].mxu0 %v463
  %v1250 = vpop.f32.mrb[0].mxu0
  %v1251 = vadd.f32 %v1168, %v1250
  %v1252 = vpop.f32.mrb[0].mxu0
  %1253 = vmatprep.mubr.f32.mxu0 0.0
  %1254 = vmatmul.mubr.f32.gmra.mrb[0].mxu0 %v563
  %v1255 = vpop.f32.mrb[0].mxu0
  %v1256 = vadd.f32 %v1168, %v1255
  %v1257 = vpop.f32.mrb[0].mxu0
  %1258 = vmatprep.mubr.f32.mxu0 0.0
  %1259 = vmatmul.mubr.f32.gmra.mrb[0].mxu0 %v663
  %v1260 = vpop.f32.mrb[0].mxu0
  %v1261 = vadd.f32 %v1168, %v1260
  %v1262 = vpop.f32.mrb[0].mxu0
  %1263 = vmatprep.mubr.f32.mxu0 0.0
  %1264 = vmatmul.mubr.f32.gmra.mrb[0].mxu0 %v763
  %v1265 = vpop.f32.mrb[0].mxu0
  %v1266 = vadd.f32 %v1168, %v1265
  %v1267 = vpop.f32.mrb[0].mxu0
  %1268 = vmatprep.mubr.f32.mxu0 0.0
  %1269 = vmatmul.mubr.f32.gmra.mrb[0].mxu0 %v863
  %v1270 = vpop.f32.mrb[0].mxu0
  %v1271 = vadd.f32 %v1168, %v1270
  %v1272 = vpop.f32.mrb[0].mxu0
  %1273 = vmatprep.mubr.f32.mxu0 0.0
  %1274 = vmatmul.mubr.f32.gmra.mrb[0].mxu0 %v963
  %v1275 = vpop.f32.mrb[0].mxu0
  %v1276 = vadd.f32 %v1168, %v1275
  %v1277 = vpop.f32.mrb[0].mxu0
  %1278 = vmatprep.mubr.f32.mxu0 0.0
  %1279 = vmatmul.mubr.f32.gmra.mrb[0].mxu0 %v1063
  %v1280 = vpop.f32.mrb[0].mxu0
  %v1281 = vadd.f32 %v1168, %v1280
  %v1282 = vpop.f32.mrb[0].mxu0
  %1283 = vmatprep.mubr.f32.mxu0 0.0
  %1284 = vmatmul.mubr.f32.gmra.mrb[0].mxu0 %v1172
  %v1285 = vpop.f32.mrb[0].mxu0
  %v1286 = vadd.f32 %v1168, %v1285
  %v1287 = vpop.f32.mrb[0].mxu0
  %1288 = vdwg.mxu0
  %1289 = vst [vmem:[%s3] sm:$0xff] %v1241
  %1290 = vst [vmem:[%s3 + $0x8] sm:$0xff] %v1246
  %1291 = vst [vmem:[%s3 + $0x10] sm:$0xff] %v1251
  %1292 = vst [vmem:[%s3 + $0x18] sm:$0xff] %v1256
  %1293 = vst [vmem:[%s3 + $0x20] sm:$0xff] %v1261
  %1294 = vst [vmem:[%s3 + $0x28] sm:$0xff] %v1266
  %1295 = vst [vmem:[%s3 + $0x30] sm:$0xff] %v1271
  %1296 = vst [vmem:[%s3 + $0x38] sm:$0xff] %v1276
  %1297 = vst [vmem:[%s3 + $0x40] sm:$0xff] %v1281
  %1298 = vst [vmem:[%s3 + $0x48] sm:$0xff] %v1286
  %1300 = vst.msk [vmem:[%s4] sm:$0xff] %vm161, %v1171
  %1302 = vrot.lane.b32.xlu0 %v1153, 96
  %v1303 = vpop.permute.xlu0 %1302
  %1305 = vst.msk [vmem:[%s4 + $0x8] sm:$0xff] %vm161, %v1303
  // Predicated region
  $region14: #{rnn_with_latent_forward.1} parent=0 // pred_check
    _
  $region15: #{rnn_with_latent_forward.1} parent=0 // pred_check_branch
    %1307 = sbr.rel (0) target = $region17
  $region16: #{rnn_with_latent_forward.1} parent=0 // pred_region
    _
  $region17: #{rnn_with_latent_forward.1} parent=0 // pred_fallthru
    _
  // Predicated region
  $region18: #{rnn_with_latent_forward.1} parent=0 // pred_check
    _
  $region19: #{rnn_with_latent_forward.1} parent=0 // pred_check_branch
    %1309 = sbr.rel (0) target = $region21
  $region20: #{rnn_with_latent_forward.1} parent=0 // pred_region
    _
  $region21: #{rnn_with_latent_forward.1} parent=0 // pred_fallthru
    _
  // Predicated region
  $region22: #{rnn_with_latent_forward.1} parent=0 // pred_check
    _
  $region23: #{rnn_with_latent_forward.1} parent=0 // pred_check_branch
    %1311 = sbr.rel (0) target = $region25
  $region24: #{rnn_with_latent_forward.1} parent=0 // pred_region
    _
  $region25: #{rnn_with_latent_forward.1} parent=0 // pred_fallthru
    _
  // Predicated region
  $region26: #{rnn_with_latent_forward.1} parent=0 // pred_check
    _
  $region27: #{rnn_with_latent_forward.1} parent=0 // pred_check_branch
    %1313 = sbr.rel (0) target = $region29
  $region28: #{rnn_with_latent_forward.1} parent=0 // pred_region
    _
  $region29: #{rnn_with_latent_forward.1} parent=0 // pred_fallthru
    _

</llo_original>
